<compile_context>
chip_gen: v6e
topology: v6e:2x2x1
jax: 0.10.0
libtpu: 0.0.40
codegen_flags: <defaults>
</compile_context>

<pallas_src>
import functools

import jax
import jax.numpy as jnp
from jax import lax
from jax.experimental import pallas as pl
from jax.experimental.pallas import tpu as pltpu


def find_group_number(channels, min_group_channels=4, max_group_channels=32):
    for num_groups in range(channels, 0, -1):
        gc = channels // num_groups
        if channels % num_groups == 0 and gc >= min_group_channels and gc <= max_group_channels:
            return num_groups
    return 1


def _im2col(x, k, padding, stride=1, dilation=1):
    """x: (B, C, H, W) -> (B, C*k*k, H_out*W_out); tap order ci*k*k + ky*k + kx.
    Only used for the tiny (3-channel) noise map; the main conv never materialises patches."""
    B, C, H, W = x.shape
    xp = jnp.pad(x, ((0, 0), (0, 0), (padding, padding), (padding, padding)))
    Hp, Wp = H + 2 * padding, W + 2 * padding
    H_out = (Hp - dilation * (k - 1) - 1) // stride + 1
    W_out = (Wp - dilation * (k - 1) - 1) // stride + 1
    cols = []
    for ky in range(k):
        for kx in range(k):
            sl = xp[:, :,
                    ky * dilation: ky * dilation + stride * (H_out - 1) + 1: stride,
                    kx * dilation: kx * dilation + stride * (W_out - 1) + 1: stride]
            cols.append(sl)
    patches = jnp.stack(cols, axis=2)                   # (B, C, k*k, H_out, W_out)
    return patches.reshape(B, C * k * k, H_out * W_out), H_out, W_out


def _conv_taps(H, W, k, pad, dil):
    """Static per-tap (roll shift, needs_mask) + (k*k, H*W) validity masks for a
    stride-1 'same' convolution done over the flattened spatial axis."""
    HW = H * W
    hh = jnp.arange(H, dtype=jnp.int32)[:, None]
    ww = jnp.arange(W, dtype=jnp.int32)[None, :]
    taps, rows = [], []
    for ky in range(k):
        for kx in range(k):
            oy = ky * dil - pad
            ox = kx * dil - pad
            # roll so that xs[i] = x[i + oy*W + ox]  (jnp.roll semantics: out[i]=x[i-shift])
            shift = (-(oy * W + ox)) % HW
            needs_mask = not (oy == 0 and ox == 0)
            valid = (hh + oy >= 0) & (hh + oy < H) & (ww + ox >= 0) & (ww + ox < W)
            rows.append(valid.reshape(1, HW))
            taps.append((shift, needs_mask))
    mask = jnp.concatenate(rows, axis=0).astype(jnp.float32)
    return mask, tuple(taps)


# ---------------------------------------------------------------------------
# Fused kernel: per batch element, everything from the conditioning network to
# the dynamic convolution.  attn is emitted as a 2nd (tiny) output for entropy.
# ---------------------------------------------------------------------------
def _fused_dynconv_kernel(np_ref, x_ref, mask_ref, wc_ref, bc_ref, gam_ref, bet_ref,
                          w1t_ref, b1_ref, w2ts_ref, b2s_ref, wk_ref, bkt_ref,
                          out_ref, attn_ref, *, taps, num_groups, out_channels):
    f32 = jnp.float32

    # ---- conditioning network: conv3x3(noise)+bias -> GroupNorm -> LeakyReLU -> mean ----
    p = np_ref[0]                                                          # (Cn*9, HW)
    y = jnp.dot(wc_ref[...], p, preferred_element_type=f32) + bc_ref[...]  # (Bu, HW)
    bu, hw = y.shape
    gc = bu // num_groups
    n_elem = gc * hw
    parts = []
    for g in range(num_groups):                                            # static, tiny
        yg = y[g * gc:(g + 1) * gc, :]
        s1 = jnp.sum(jnp.sum(yg, axis=1, keepdims=True), axis=0, keepdims=True)
        s2 = jnp.sum(jnp.sum(yg * yg, axis=1, keepdims=True), axis=0, keepdims=True)
        mu = s1 / n_elem
        var = s2 / n_elem - mu * mu                                        # one-pass stats
        parts.append((yg - mu) * lax.rsqrt(var + 1e-5))                    # GroupNorm eps
    yhat = parts[0] if num_groups == 1 else jnp.concatenate(parts, axis=0)
    yhat = yhat * gam_ref[...] + bet_ref[...]
    z = jnp.where(yhat > 0, yhat, 0.01 * yhat)                             # LeakyReLU(0.01)
    nctx = jnp.mean(z, axis=1, keepdims=True)                              # (Bu, 1)

    # ---- attention MLP + temperature softmax (column oriented) ----
    xmat = x_ref[0]                                                        # (C_in, HW)
    # mean(W1^T @ x) == W1^T @ mean(x): keeps the MXU op well shaped (N = HW).
    hx = jnp.dot(w1t_ref[...], xmat, preferred_element_type=f32)           # (Bu, HW)
    h = jnp.mean(hx, axis=1, keepdims=True) + b1_ref[...] + nctx           # (Bu, 1)
    h = jnp.where(h > 0, h, 0.01 * h)                                      # LeakyReLU
    # 1/temperature is pre-folded into w2ts / b2s in the wrapper.
    logits = b2s_ref[...]                                                  # (K, 1)
    for i in range(bu):                                                    # tiny rank-1 MLP
        logits = logits + h[i:i + 1, 0:1] * w2ts_ref[:, i:i + 1]
    m = jnp.max(logits, axis=0, keepdims=True)
    e = jnp.exp(logits - m)
    a = e / jnp.sum(e, axis=0, keepdims=True)                              # (K, 1) attention
    attn_ref[0] = a

    # ---- mix the parallel kernels / biases with the attention scores ----
    num_kernels = wk_ref.shape[0]
    w_mix = jnp.zeros(wk_ref.shape[1:], f32)                               # (k*k*C_out, C_in)
    bias = jnp.zeros((out_channels, 1), f32)
    for kk_i in range(num_kernels):                                        # small, unrolled
        ak = a[kk_i:kk_i + 1, 0:1]                                         # (1, 1)
        w_mix = w_mix + ak * wk_ref[kk_i]
        bias = bias + ak * bkt_ref[:, kk_i:kk_i + 1]

    # ---- dynamic conv: k*k shifted MXU matmuls over the flattened spatial axis ----
    acc = jnp.zeros((out_channels, xmat.shape[1]), f32)
    for t, (shift, needs_mask) in enumerate(taps):                         # static, k*k taps
        xs = xmat if shift == 0 else pltpu.roll(xmat, shift, 1)
        if needs_mask:
            xs = xs * mask_ref[pl.ds(t, 1), :]                             # zero wrapped edges
        w_t = w_mix[t * out_channels:(t + 1) * out_channels, :]            # (C_out, C_in)
        acc = acc + jnp.dot(w_t, xs, preferred_element_type=f32)
    out_ref[0] = (acc + bias).astype(out_ref.dtype)


@functools.partial(jax.jit,
                   static_argnames=("kernel_size", "padding", "dilation", "num_groups"))
def _dynconv_forward(params, x, noise_map, temperature, *,
                     kernel_size, padding, dilation, num_groups):
    B, C, H, W = x.shape
    HW = H * W
    f32 = jnp.float32

    # cheap XLA-side prep: noise-map im2col (3 -> 27 channels only) + conv tap masks,
    # and folding 1/temperature into the last attention layer.
    np_patch, _, _ = _im2col(noise_map, 3, 1)
    mask_x, taps = _conv_taps(H, W, kernel_size, padding, dilation)
    xf = x.reshape(B, C, HW)
    inv_t = 1.0 / jnp.asarray(temperature, f32)
    w2ts = params["w2t"] * inv_t                                           # (K, Bu)
    b2s = params["b2"] * inv_t                                             # (K, 1)

    Tn = np_patch.shape[1]
    Bu = params["wc"].shape[0]
    C_out, K = params["bkt"].shape
    kk = kernel_size * kernel_size

    kernel = functools.partial(_fused_dynconv_kernel, taps=taps,
                               num_groups=num_groups, out_channels=C_out)
    out, attn3 = pl.pallas_call(
        kernel,
        out_shape=(jax.ShapeDtypeStruct((B, C_out, HW), f32),
                   jax.ShapeDtypeStruct((B, K, 1), f32)),
        grid=(B,),
        in_specs=[
            pl.BlockSpec((1, Tn, HW), lambda b: (b, 0, 0)),        # noise patches (per b)
            pl.BlockSpec((1, C, HW), lambda b: (b, 0, 0)),         # x (per b, read once)
            pl.BlockSpec((kk, HW), lambda b: (0, 0)),              # conv edge masks (invariant)
            pl.BlockSpec((Bu, Tn), lambda b: (0, 0)),              # cond conv weight
            pl.BlockSpec((Bu, 1), lambda b: (0, 0)),               # cond conv bias
            pl.BlockSpec((Bu, 1), lambda b: (0, 0)),               # GroupNorm gamma
            pl.BlockSpec((Bu, 1), lambda b: (0, 0)),               # GroupNorm beta
            pl.BlockSpec((Bu, C), lambda b: (0, 0)),               # Dense W1^T
            pl.BlockSpec((Bu, 1), lambda b: (0, 0)),               # Dense b1
            pl.BlockSpec((K, Bu), lambda b: (0, 0)),               # Dense_2 W2^T / T
            pl.BlockSpec((K, 1), lambda b: (0, 0)),                # Dense_2 b2 / T
            pl.BlockSpec((K, kk * C_out, C), lambda b: (0, 0, 0)), # parallel kernels (tap-major)
            pl.BlockSpec((C_out, K), lambda b: (0, 0)),            # parallel biases^T
        ],
        out_specs=(pl.BlockSpec((1, C_out, HW), lambda b: (b, 0, 0)),   # lane-dense output
                   pl.BlockSpec((1, K, 1), lambda b: (b, 0, 0))),
        compiler_params=pltpu.CompilerParams(dimension_semantics=("parallel",)),
    )(np_patch, xf, mask_x, params["wc"], params["bc"], params["gamma"], params["beta"],
      params["w1t"], params["b1"], w2ts, b2s, params["wk"], params["bkt"])

    attn = attn3[:, :, 0]                                                  # (B, K)
    # entropy bookkeeping fused into the same jit: stays a device scalar, no host sync
    neg_entropy = -jnp.sum(attn * jnp.log(attn + 1e-6), axis=1)            # module eps = 1e-6
    entropy_value = -jnp.mean(neg_entropy)
    return out.reshape(B, C_out, H, W), attn, entropy_value


class DynamicConv2dPallas:
    def __init__(self, key, in_channels, out_channels, kernel_size, stride=1, padding=0,
                 groups=1, reduction_factor=16, num_kernels=4, dilation=1, bias=True,
                 noise_channels=3):
        # TODO(synk): grouped dynamic conv (groups > 1) is not lowered in the Pallas kernel.
        assert groups == 1
        # TODO(synk): only stride-1 'same' convolutions are lowered in-kernel (roll-based
        # shifted matmuls); general stride / output size would need an im2col path.
        assert stride == 1 and 2 * padding == dilation * (kernel_size - 1)
        self.in_channels, self.out_channels = in_channels, out_channels
        self.kernel_size, self.stride, self.padding = kernel_size, stride, padding
        self.dilation, self.groups = dilation, groups
        self.num_kernels = num_kernels
        self.noise_channels = noise_channels
        self.bottleneck_units = in_channels // reduction_factor
        self.num_groups = find_group_number(self.bottleneck_units)
        self.eps = 1e-6
        self.Entropy = 0.0   # accumulated lazily as a device scalar (no host sync)

        Bu, K = self.bottleneck_units, num_kernels
        ks = jax.random.split(key, 8)
        f32 = jnp.float32
        # deterministic synthetic parameters (scaled normals)
        self.Wc = 0.2 * jax.random.normal(ks[0], (Bu, noise_channels, 3, 3), f32)
        self.bc = 0.1 * jax.random.normal(ks[1], (Bu,), f32)
        self.gamma = jnp.ones((Bu,), f32)
        self.beta = jnp.zeros((Bu,), f32)
        self.W1 = 0.2 * jax.random.normal(ks[2], (in_channels, Bu), f32)
        self.b1 = 0.1 * jax.random.normal(ks[3], (Bu,), f32)
        self.W2 = 0.2 * jax.random.normal(ks[4], (Bu, K), f32)
        self.b2 = 0.1 * jax.random.normal(ks[5], (K,), f32)
        self.Parallel_Kernels = 0.1 * jax.random.normal(
            ks[6], (K, out_channels, in_channels // groups, kernel_size, kernel_size), f32)
        if bias:
            self.Parallel_Biases = 0.1 * jax.random.normal(ks[7], (K, out_channels), f32)
        else:
            self.Parallel_Biases = jnp.zeros((K, out_channels), f32)

        # pre-arranged parameter tree consumed by the fused kernel
        kk = kernel_size * kernel_size
        self.kernel_params = {
            "wc": self.Wc.reshape(Bu, -1),                       # (Bu, Cn*9)
            "bc": self.bc[:, None],
            "gamma": self.gamma[:, None],
            "beta": self.beta[:, None],
            "w1t": self.W1.T,                                    # (Bu, C_in)
            "b1": self.b1[:, None],
            "w2t": self.W2.T,                                    # (K, Bu)
            "b2": self.b2[:, None],
            # (K, C_out, C_in, ky, kx) -> (K, (ky,kx,C_out), C_in): tap-major weight rows
            "wk": jnp.transpose(self.Parallel_Kernels, (0, 3, 4, 1, 2))
                     .reshape(K, kk * out_channels, in_channels // groups),
            "bkt": self.Parallel_Biases.T,                       # (C_out, K)
        }

    # ----------------------- forward -----------------------
    def forward(self, x, noise_map, temperature):
        out, _attn, entropy_value = _dynconv_forward(
            self.kernel_params, x, noise_map, temperature,
            kernel_size=self.kernel_size, padding=self.padding,
            dilation=self.dilation, num_groups=self.num_groups)
        # entropy accumulation stays on device: no float()/.item() sync in the hot path
        self.Entropy = self.Entropy + entropy_value
        return out


# ----------------- pure-JAX reference (for correctness check) -----------------
def reference_forward(mod, x, noise_map, temperature):
    y = lax.conv_general_dilated(noise_map, mod.Wc, (1, 1), ((1, 1), (1, 1)),
                                 dimension_numbers=('NCHW', 'OIHW', 'NCHW'))
    y = y + mod.bc[None, :, None, None]
    B, Bu, H, W = y.shape
    G = mod.num_groups
    yg = y.reshape(B, G, Bu // G, H, W)
    mu = jnp.mean(yg, axis=(2, 3, 4), keepdims=True)
    var = jnp.mean((yg - mu) ** 2, axis=(2, 3, 4), keepdims=True)
    y = ((yg - mu) / jnp.sqrt(var + 1e-5)).reshape(B, Bu, H, W)
    y = y * mod.gamma[None, :, None, None] + mod.beta[None, :, None, None]
    y = jnp.where(y > 0, y, 0.01 * y)
    nctx = jnp.mean(y, axis=(2, 3))
    xp = jnp.mean(x, axis=(2, 3))
    h = xp @ mod.W1 + mod.b1 + nctx
    h = jnp.where(h > 0, h, 0.01 * h)
    logits = h @ mod.W2 + mod.b2
    a = jax.nn.softmax(logits / temperature, axis=-1)
    wflat = mod.Parallel_Kernels.reshape(mod.num_kernels, -1)
    Wb = (a @ wflat).reshape(B, mod.out_channels, mod.in_channels // mod.groups,
                             mod.kernel_size, mod.kernel_size)
    bb = a @ mod.Parallel_Biases
    outs = []
    for b in range(x.shape[0]):
        ob = lax.conv_general_dilated(
            x[b:b + 1], Wb[b], (mod.stride, mod.stride),
            ((mod.padding, mod.padding), (mod.padding, mod.padding)),
            rhs_dilation=(mod.dilation, mod.dilation),
            dimension_numbers=('NCHW', 'OIHW', 'NCHW'))
        outs.append(ob + bb[b][None, :, None, None])
    return jnp.concatenate(outs, axis=0), a


if __name__ == "__main__":
    root = jax.random.PRNGKey(0)
    k_params, k_x, k_noise = jax.random.split(root, 3)

    B, C_in, H, W = 2, 16, 16, 16
    C_out, ksz = 8, 3
    mod = DynamicConv2dPallas(k_params, in_channels=C_in, out_channels=C_out,
                              kernel_size=ksz, stride=1, padding=1, groups=1,
                              reduction_factor=4, num_kernels=4, dilation=1,
                              bias=True, noise_channels=3)

    x = jax.random.normal(k_x, (B, C_in, H, W), jnp.float32)
    noise_map = jax.random.normal(k_noise, (B, 3, H, W), jnp.float32)
    temperature = 0.7

    out = mod.forward(x, noise_map, temperature)
    out = jax.block_until_ready(out)
    _ = jax.block_until_ready(mod.Entropy)

    ref, _ = reference_forward(mod, x, noise_map, temperature)
    assert out.shape == (B, C_out, H, W), out.shape
    max_err = float(jnp.max(jnp.abs(out - ref)))
    assert jnp.allclose(out, ref, rtol=2e-3, atol=2e-3), f"max abs err {max_err}"

    print("KERNEL_OK")
</pallas_src>

<mosaic_0001>
module attributes {stable_mosaic.version = 11 : i64} {
  func.func @_fused_dynconv_kernel(%arg0: i32, %arg1: memref<1x27x256xf32, #tpu.memory_space<vmem>>, %arg2: memref<1x16x256xf32, #tpu.memory_space<vmem>>, %arg3: memref<9x256xf32, #tpu.memory_space<vmem>>, %arg4: memref<4x27xf32, #tpu.memory_space<vmem>>, %arg5: memref<4x1xf32, #tpu.memory_space<vmem>>, %arg6: memref<4x1xf32, #tpu.memory_space<vmem>>, %arg7: memref<4x1xf32, #tpu.memory_space<vmem>>, %arg8: memref<4x16xf32, #tpu.memory_space<vmem>>, %arg9: memref<4x1xf32, #tpu.memory_space<vmem>>, %arg10: memref<4x4xf32, #tpu.memory_space<vmem>>, %arg11: memref<4x1xf32, #tpu.memory_space<vmem>>, %arg12: memref<4x72x16xf32, #tpu.memory_space<vmem>>, %arg13: memref<8x4xf32, #tpu.memory_space<vmem>>, %arg14: memref<1x8x256xf32, #tpu.memory_space<vmem>>, %arg15: memref<1x4x1xf32, #tpu.memory_space<vmem>>) attributes {dimension_semantics = [#tpu.dimension_semantics<parallel>], iteration_bounds = array<i64: 2>, scalar_prefetch = 0 : i64, scratch_operands = 0 : i64, tpu.core_type = #tpu.core_type<tc>, window_params = [{transform_indices = @transform_0, window_bounds = array<i64: 1, 27, 256>}, {transform_indices = @transform_1, window_bounds = array<i64: 1, 16, 256>}, {pipeline_mode = #tpu.pipeline_mode<synchronous>, transform_indices = @transform_2, window_bounds = array<i64: 9, 256>}, {pipeline_mode = #tpu.pipeline_mode<synchronous>, transform_indices = @transform_3, window_bounds = array<i64: 4, 27>}, {pipeline_mode = #tpu.pipeline_mode<synchronous>, transform_indices = @transform_4, window_bounds = array<i64: 4, 1>}, {pipeline_mode = #tpu.pipeline_mode<synchronous>, transform_indices = @transform_5, window_bounds = array<i64: 4, 1>}, {pipeline_mode = #tpu.pipeline_mode<synchronous>, transform_indices = @transform_6, window_bounds = array<i64: 4, 1>}, {pipeline_mode = #tpu.pipeline_mode<synchronous>, transform_indices = @transform_7, window_bounds = array<i64: 4, 16>}, {pipeline_mode = #tpu.pipeline_mode<synchronous>, transform_indices = @transform_8, window_bounds = array<i64: 4, 1>}, {pipeline_mode = #tpu.pipeline_mode<synchronous>, transform_indices = @transform_9, window_bounds = array<i64: 4, 4>}, {pipeline_mode = #tpu.pipeline_mode<synchronous>, transform_indices = @transform_10, window_bounds = array<i64: 4, 1>}, {pipeline_mode = #tpu.pipeline_mode<synchronous>, transform_indices = @transform_11, window_bounds = array<i64: 4, 72, 16>}, {pipeline_mode = #tpu.pipeline_mode<synchronous>, transform_indices = @transform_12, window_bounds = array<i64: 8, 4>}, {transform_indices = @transform_13, window_bounds = array<i64: 1, 8, 256>}, {transform_indices = @transform_14, window_bounds = array<i64: 1, 4, 1>}]} {
    %c0 = arith.constant 0 : index
    %c0_0 = arith.constant 0 : index
    %c0_1 = arith.constant 0 : index
    %0 = vector.load %arg1[%c0, %c0_0, %c0_1] : memref<1x27x256xf32, #tpu.memory_space<vmem>>, vector<1x27x256xf32>
    %1 = vector.shape_cast %0 : vector<1x27x256xf32> to vector<27x256xf32>
    %c0_2 = arith.constant 0 : index
    %c0_3 = arith.constant 0 : index
    %2 = vector.load %arg4[%c0_2, %c0_3] : memref<4x27xf32, #tpu.memory_space<vmem>>, vector<4x27xf32>
    %cst = arith.constant dense<0.000000e+00> : vector<4x256xf32>
    %3 = tpu.matmul %2, %1, %cst {dimension_numbers = #tpu.dot_dimension_numbers<[1], [0], [0], [1], [0, 0, 1, 1], [], []>} : vector<4x27xf32>, vector<27x256xf32>, vector<4x256xf32> -> vector<4x256xf32>
    %c0_4 = arith.constant 0 : index
    %c0_5 = arith.constant 0 : index
    %4 = vector.load %arg5[%c0_4, %c0_5] : memref<4x1xf32, #tpu.memory_space<vmem>>, vector<4x1xf32>
    %5 = vector.broadcast %4 : vector<4x1xf32> to vector<4x256xf32>
    %6 = arith.addf %3, %5 : vector<4x256xf32>
    %cst_6 = arith.constant dense<0.000000e+00> : vector<4xf32>
    %7 = vector.multi_reduction <add>, %6, %cst_6 [1] : vector<4x256xf32> to vector<4xf32>
    %8 = vector.shape_cast %7 : vector<4xf32> to vector<4x1xf32>
    %cst_7 = arith.constant dense<0.000000e+00> : vector<1xf32>
    %9 = vector.multi_reduction <add>, %8, %cst_7 [0] : vector<4x1xf32> to vector<1xf32>
    %10 = vector.shape_cast %9 : vector<1xf32> to vector<1x1xf32>
    %11 = arith.mulf %6, %6 : vector<4x256xf32>
    %cst_8 = arith.constant dense<0.000000e+00> : vector<4xf32>
    %12 = vector.multi_reduction <add>, %11, %cst_8 [1] : vector<4x256xf32> to vector<4xf32>
    %13 = vector.shape_cast %12 : vector<4xf32> to vector<4x1xf32>
    %cst_9 = arith.constant dense<0.000000e+00> : vector<1xf32>
    %14 = vector.multi_reduction <add>, %13, %cst_9 [0] : vector<4x1xf32> to vector<1xf32>
    %15 = vector.shape_cast %14 : vector<1xf32> to vector<1x1xf32>
    %cst_10 = arith.constant 1.024000e+03 : f32
    %16 = vector.broadcast %cst_10 : f32 to vector<1x1xf32>
    %17 = arith.divf %10, %16 : vector<1x1xf32>
    %cst_11 = arith.constant 1.024000e+03 : f32
    %18 = vector.broadcast %cst_11 : f32 to vector<1x1xf32>
    %19 = arith.divf %15, %18 : vector<1x1xf32>
    %20 = arith.mulf %17, %17 : vector<1x1xf32>
    %21 = arith.subf %19, %20 : vector<1x1xf32>
    %22 = vector.broadcast %17 : vector<1x1xf32> to vector<4x256xf32>
    %23 = arith.subf %6, %22 : vector<4x256xf32>
    %cst_12 = arith.constant 9.99999974E-6 : f32
    %24 = vector.broadcast %cst_12 : f32 to vector<1x1xf32>
    %25 = arith.addf %21, %24 : vector<1x1xf32>
    %26 = math.rsqrt %25 : vector<1x1xf32>
    %27 = vector.broadcast %26 : vector<1x1xf32> to vector<4x256xf32>
    %28 = arith.mulf %23, %27 : vector<4x256xf32>
    %c0_13 = arith.constant 0 : index
    %c0_14 = arith.constant 0 : index
    %29 = vector.load %arg6[%c0_13, %c0_14] : memref<4x1xf32, #tpu.memory_space<vmem>>, vector<4x1xf32>
    %30 = vector.broadcast %29 : vector<4x1xf32> to vector<4x256xf32>
    %31 = arith.mulf %28, %30 : vector<4x256xf32>
    %c0_15 = arith.constant 0 : index
    %c0_16 = arith.constant 0 : index
    %32 = vector.load %arg7[%c0_15, %c0_16] : memref<4x1xf32, #tpu.memory_space<vmem>>, vector<4x1xf32>
    %33 = vector.broadcast %32 : vector<4x1xf32> to vector<4x256xf32>
    %34 = arith.addf %31, %33 : vector<4x256xf32>
    %cst_17 = arith.constant 0.000000e+00 : f32
    %35 = vector.broadcast %cst_17 : f32 to vector<4x256xf32>
    %36 = arith.cmpf ogt, %34, %35 : vector<4x256xf32>
    %cst_18 = arith.constant 0.00999999977 : f32
    %37 = vector.broadcast %cst_18 : f32 to vector<4x256xf32>
    %38 = arith.mulf %37, %34 : vector<4x256xf32>
    %39 = arith.select %36, %34, %38 : vector<4x256xi1>, vector<4x256xf32>
    %cst_19 = arith.constant dense<0.000000e+00> : vector<4xf32>
    %40 = vector.multi_reduction <add>, %39, %cst_19 [1] : vector<4x256xf32> to vector<4xf32>
    %41 = vector.shape_cast %40 : vector<4xf32> to vector<4x1xf32>
    %cst_20 = arith.constant 2.560000e+02 : f32
    %42 = vector.broadcast %cst_20 : f32 to vector<4x1xf32>
    %43 = arith.divf %41, %42 : vector<4x1xf32>
    %c0_21 = arith.constant 0 : index
    %c0_22 = arith.constant 0 : index
    %c0_23 = arith.constant 0 : index
    %44 = vector.load %arg2[%c0_21, %c0_22, %c0_23] : memref<1x16x256xf32, #tpu.memory_space<vmem>>, vector<1x16x256xf32>
    %45 = vector.shape_cast %44 : vector<1x16x256xf32> to vector<16x256xf32>
    %c0_24 = arith.constant 0 : index
    %c0_25 = arith.constant 0 : index
    %46 = vector.load %arg8[%c0_24, %c0_25] : memref<4x16xf32, #tpu.memory_space<vmem>>, vector<4x16xf32>
    %cst_26 = arith.constant dense<0.000000e+00> : vector<4x256xf32>
    %47 = tpu.matmul %46, %45, %cst_26 {dimension_numbers = #tpu.dot_dimension_numbers<[1], [0], [0], [1], [0, 0, 1, 1], [], []>} : vector<4x16xf32>, vector<16x256xf32>, vector<4x256xf32> -> vector<4x256xf32>
    %cst_27 = arith.constant dense<0.000000e+00> : vector<4xf32>
    %48 = vector.multi_reduction <add>, %47, %cst_27 [1] : vector<4x256xf32> to vector<4xf32>
    %49 = vector.shape_cast %48 : vector<4xf32> to vector<4x1xf32>
    %cst_28 = arith.constant 2.560000e+02 : f32
    %50 = vector.broadcast %cst_28 : f32 to vector<4x1xf32>
    %51 = arith.divf %49, %50 : vector<4x1xf32>
    %c0_29 = arith.constant 0 : index
    %c0_30 = arith.constant 0 : index
    %52 = vector.load %arg9[%c0_29, %c0_30] : memref<4x1xf32, #tpu.memory_space<vmem>>, vector<4x1xf32>
    %53 = arith.addf %51, %52 : vector<4x1xf32>
    %54 = arith.addf %53, %43 : vector<4x1xf32>
    %cst_31 = arith.constant 0.000000e+00 : f32
    %55 = vector.broadcast %cst_31 : f32 to vector<4x1xf32>
    %56 = arith.cmpf ogt, %54, %55 : vector<4x1xf32>
    %cst_32 = arith.constant 0.00999999977 : f32
    %57 = vector.broadcast %cst_32 : f32 to vector<4x1xf32>
    %58 = arith.mulf %57, %54 : vector<4x1xf32>
    %59 = arith.select %56, %54, %58 : vector<4x1xi1>, vector<4x1xf32>
    %c0_33 = arith.constant 0 : index
    %c0_34 = arith.constant 0 : index
    %60 = vector.load %arg11[%c0_33, %c0_34] : memref<4x1xf32, #tpu.memory_space<vmem>>, vector<4x1xf32>
    %61 = vector.extract_strided_slice %59 {offsets = [0, 0], sizes = [1, 1], strides = [1, 1]} : vector<4x1xf32> to vector<1x1xf32>
    %c0_35 = arith.constant 0 : index
    %c0_36 = arith.constant 0 : index
    %62 = vector.load %arg10[%c0_35, %c0_36] : memref<4x4xf32, #tpu.memory_space<vmem>>, vector<4x1xf32>
    %63 = vector.broadcast %61 : vector<1x1xf32> to vector<4x1xf32>
    %64 = arith.mulf %63, %62 : vector<4x1xf32>
    %65 = arith.addf %60, %64 : vector<4x1xf32>
    %66 = vector.extract_strided_slice %59 {offsets = [1, 0], sizes = [1, 1], strides = [1, 1]} : vector<4x1xf32> to vector<1x1xf32>
    %c0_37 = arith.constant 0 : index
    %c1 = arith.constant 1 : index
    %67 = vector.load %arg10[%c0_37, %c1] : memref<4x4xf32, #tpu.memory_space<vmem>>, vector<4x1xf32>
    %68 = vector.broadcast %66 : vector<1x1xf32> to vector<4x1xf32>
    %69 = arith.mulf %68, %67 : vector<4x1xf32>
    %70 = arith.addf %65, %69 : vector<4x1xf32>
    %71 = vector.extract_strided_slice %59 {offsets = [2, 0], sizes = [1, 1], strides = [1, 1]} : vector<4x1xf32> to vector<1x1xf32>
    %c0_38 = arith.constant 0 : index
    %c2 = arith.constant 2 : index
    %72 = vector.load %arg10[%c0_38, %c2] : memref<4x4xf32, #tpu.memory_space<vmem>>, vector<4x1xf32>
    %73 = vector.broadcast %71 : vector<1x1xf32> to vector<4x1xf32>
    %74 = arith.mulf %73, %72 : vector<4x1xf32>
    %75 = arith.addf %70, %74 : vector<4x1xf32>
    %76 = vector.extract_strided_slice %59 {offsets = [3, 0], sizes = [1, 1], strides = [1, 1]} : vector<4x1xf32> to vector<1x1xf32>
    %c0_39 = arith.constant 0 : index
    %c3 = arith.constant 3 : index
    %77 = vector.load %arg10[%c0_39, %c3] : memref<4x4xf32, #tpu.memory_space<vmem>>, vector<4x1xf32>
    %78 = vector.broadcast %76 : vector<1x1xf32> to vector<4x1xf32>
    %79 = arith.mulf %78, %77 : vector<4x1xf32>
    %80 = arith.addf %75, %79 : vector<4x1xf32>
    %cst_40 = arith.constant dense<0xFF800000> : vector<1xf32>
    %81 = vector.multi_reduction <maximumf>, %80, %cst_40 [0] : vector<4x1xf32> to vector<1xf32>
    %82 = vector.shape_cast %81 : vector<1xf32> to vector<1x1xf32>
    %83 = vector.broadcast %82 : vector<1x1xf32> to vector<4x1xf32>
    %84 = arith.subf %80, %83 : vector<4x1xf32>
    %85 = math.exp %84 : vector<4x1xf32>
    %cst_41 = arith.constant dense<0.000000e+00> : vector<1xf32>
    %86 = vector.multi_reduction <add>, %85, %cst_41 [0] : vector<4x1xf32> to vector<1xf32>
    %87 = vector.shape_cast %86 : vector<1xf32> to vector<1x1xf32>
    %88 = vector.broadcast %87 : vector<1x1xf32> to vector<4x1xf32>
    %89 = arith.divf %85, %88 : vector<4x1xf32>
    %c0_42 = arith.constant 0 : index
    %c0_43 = arith.constant 0 : index
    %c0_44 = arith.constant 0 : index
    %90 = vector.load %arg15[%c0_42, %c0_43, %c0_44] : memref<1x4x1xf32, #tpu.memory_space<vmem>>, vector<1x4x1xf32>
    %91 = vector.shape_cast %90 : vector<1x4x1xf32> to vector<4x1xf32>
    %92 = vector.shape_cast %89 : vector<4x1xf32> to vector<1x4x1xf32>
    tpu.vector_store %arg15[%c0_42, %c0_43, %c0_44], %92 {strides = array<i32>} : memref<1x4x1xf32, #tpu.memory_space<vmem>>, vector<1x4x1xf32>,
    %cst_45 = arith.constant 0.000000e+00 : f32
    %93 = vector.broadcast %cst_45 : f32 to vector<72x16xf32>
    %cst_46 = arith.constant 0.000000e+00 : f32
    %94 = vector.broadcast %cst_46 : f32 to vector<8x1xf32>
    %95 = vector.extract_strided_slice %89 {offsets = [0, 0], sizes = [1, 1], strides = [1, 1]} : vector<4x1xf32> to vector<1x1xf32>
    %c0_47 = arith.constant 0 : index
    %c0_48 = arith.constant 0 : index
    %c0_49 = arith.constant 0 : index
    %96 = vector.load %arg12[%c0_47, %c0_48, %c0_49] : memref<4x72x16xf32, #tpu.memory_space<vmem>>, vector<1x72x16xf32>
    %97 = vector.shape_cast %96 : vector<1x72x16xf32> to vector<72x16xf32>
    %98 = vector.broadcast %95 : vector<1x1xf32> to vector<72x16xf32>
    %99 = arith.mulf %98, %97 : vector<72x16xf32>
    %100 = arith.addf %93, %99 : vector<72x16xf32>
    %c0_50 = arith.constant 0 : index
    %c0_51 = arith.constant 0 : index
    %101 = vector.load %arg13[%c0_50, %c0_51] : memref<8x4xf32, #tpu.memory_space<vmem>>, vector<8x1xf32>
    %102 = vector.broadcast %95 : vector<1x1xf32> to vector<8x1xf32>
    %103 = arith.mulf %102, %101 : vector<8x1xf32>
    %104 = arith.addf %94, %103 : vector<8x1xf32>
    %105 = vector.extract_strided_slice %89 {offsets = [1, 0], sizes = [1, 1], strides = [1, 1]} : vector<4x1xf32> to vector<1x1xf32>
    %c1_52 = arith.constant 1 : index
    %c0_53 = arith.constant 0 : index
    %c0_54 = arith.constant 0 : index
    %106 = vector.load %arg12[%c1_52, %c0_53, %c0_54] : memref<4x72x16xf32, #tpu.memory_space<vmem>>, vector<1x72x16xf32>
    %107 = vector.shape_cast %106 : vector<1x72x16xf32> to vector<72x16xf32>
    %108 = vector.broadcast %105 : vector<1x1xf32> to vector<72x16xf32>
    %109 = arith.mulf %108, %107 : vector<72x16xf32>
    %110 = arith.addf %100, %109 : vector<72x16xf32>
    %c0_55 = arith.constant 0 : index
    %c1_56 = arith.constant 1 : index
    %111 = vector.load %arg13[%c0_55, %c1_56] : memref<8x4xf32, #tpu.memory_space<vmem>>, vector<8x1xf32>
    %112 = vector.broadcast %105 : vector<1x1xf32> to vector<8x1xf32>
    %113 = arith.mulf %112, %111 : vector<8x1xf32>
    %114 = arith.addf %104, %113 : vector<8x1xf32>
    %115 = vector.extract_strided_slice %89 {offsets = [2, 0], sizes = [1, 1], strides = [1, 1]} : vector<4x1xf32> to vector<1x1xf32>
    %c2_57 = arith.constant 2 : index
    %c0_58 = arith.constant 0 : index
    %c0_59 = arith.constant 0 : index
    %116 = vector.load %arg12[%c2_57, %c0_58, %c0_59] : memref<4x72x16xf32, #tpu.memory_space<vmem>>, vector<1x72x16xf32>
    %117 = vector.shape_cast %116 : vector<1x72x16xf32> to vector<72x16xf32>
    %118 = vector.broadcast %115 : vector<1x1xf32> to vector<72x16xf32>
    %119 = arith.mulf %118, %117 : vector<72x16xf32>
    %120 = arith.addf %110, %119 : vector<72x16xf32>
    %c0_60 = arith.constant 0 : index
    %c2_61 = arith.constant 2 : index
    %121 = vector.load %arg13[%c0_60, %c2_61] : memref<8x4xf32, #tpu.memory_space<vmem>>, vector<8x1xf32>
    %122 = vector.broadcast %115 : vector<1x1xf32> to vector<8x1xf32>
    %123 = arith.mulf %122, %121 : vector<8x1xf32>
    %124 = arith.addf %114, %123 : vector<8x1xf32>
    %125 = vector.extract_strided_slice %89 {offsets = [3, 0], sizes = [1, 1], strides = [1, 1]} : vector<4x1xf32> to vector<1x1xf32>
    %c3_62 = arith.constant 3 : index
    %c0_63 = arith.constant 0 : index
    %c0_64 = arith.constant 0 : index
    %126 = vector.load %arg12[%c3_62, %c0_63, %c0_64] : memref<4x72x16xf32, #tpu.memory_space<vmem>>, vector<1x72x16xf32>
    %127 = vector.shape_cast %126 : vector<1x72x16xf32> to vector<72x16xf32>
    %128 = vector.broadcast %125 : vector<1x1xf32> to vector<72x16xf32>
    %129 = arith.mulf %128, %127 : vector<72x16xf32>
    %130 = arith.addf %120, %129 : vector<72x16xf32>
    %c0_65 = arith.constant 0 : index
    %c3_66 = arith.constant 3 : index
    %131 = vector.load %arg13[%c0_65, %c3_66] : memref<8x4xf32, #tpu.memory_space<vmem>>, vector<8x1xf32>
    %132 = vector.broadcast %125 : vector<1x1xf32> to vector<8x1xf32>
    %133 = arith.mulf %132, %131 : vector<8x1xf32>
    %134 = arith.addf %124, %133 : vector<8x1xf32>
    %cst_67 = arith.constant 0.000000e+00 : f32
    %135 = vector.broadcast %cst_67 : f32 to vector<8x256xf32>
    %c17_i32 = arith.constant 17 : i32
    %136 = tpu.dynamic_rotate %45 by %c17_i32 dim 1 : vector<16x256xf32>, i32 -> vector<16x256xf32>
    %c0_68 = arith.constant 0 : index
    %c0_69 = arith.constant 0 : index
    %137 = vector.load %arg3[%c0_68, %c0_69] : memref<9x256xf32, #tpu.memory_space<vmem>>, vector<1x256xf32>
    %138 = vector.broadcast %137 : vector<1x256xf32> to vector<16x256xf32>
    %139 = arith.mulf %136, %138 : vector<16x256xf32>
    %140 = vector.extract_strided_slice %130 {offsets = [0, 0], sizes = [8, 16], strides = [1, 1]} : vector<72x16xf32> to vector<8x16xf32>
    %cst_70 = arith.constant dense<0.000000e+00> : vector<8x256xf32>
    %141 = tpu.matmul %140, %139, %cst_70 {dimension_numbers = #tpu.dot_dimension_numbers<[1], [0], [0], [1], [0, 0, 1, 1], [], []>} : vector<8x16xf32>, vector<16x256xf32>, vector<8x256xf32> -> vector<8x256xf32>
    %142 = arith.addf %135, %141 : vector<8x256xf32>
    %c16_i32 = arith.constant 16 : i32
    %143 = tpu.dynamic_rotate %45 by %c16_i32 dim 1 : vector<16x256xf32>, i32 -> vector<16x256xf32>
    %c1_71 = arith.constant 1 : index
    %c0_72 = arith.constant 0 : index
    %144 = vector.load %arg3[%c1_71, %c0_72] : memref<9x256xf32, #tpu.memory_space<vmem>>, vector<1x256xf32>
    %145 = vector.broadcast %144 : vector<1x256xf32> to vector<16x256xf32>
    %146 = arith.mulf %143, %145 : vector<16x256xf32>
    %147 = vector.extract_strided_slice %130 {offsets = [8, 0], sizes = [8, 16], strides = [1, 1]} : vector<72x16xf32> to vector<8x16xf32>
    %cst_73 = arith.constant dense<0.000000e+00> : vector<8x256xf32>
    %148 = tpu.matmul %147, %146, %cst_73 {dimension_numbers = #tpu.dot_dimension_numbers<[1], [0], [0], [1], [0, 0, 1, 1], [], []>} : vector<8x16xf32>, vector<16x256xf32>, vector<8x256xf32> -> vector<8x256xf32>
    %149 = arith.addf %142, %148 : vector<8x256xf32>
    %c15_i32 = arith.constant 15 : i32
    %150 = tpu.dynamic_rotate %45 by %c15_i32 dim 1 : vector<16x256xf32>, i32 -> vector<16x256xf32>
    %c2_74 = arith.constant 2 : index
    %c0_75 = arith.constant 0 : index
    %151 = vector.load %arg3[%c2_74, %c0_75] : memref<9x256xf32, #tpu.memory_space<vmem>>, vector<1x256xf32>
    %152 = vector.broadcast %151 : vector<1x256xf32> to vector<16x256xf32>
    %153 = arith.mulf %150, %152 : vector<16x256xf32>
    %154 = vector.extract_strided_slice %130 {offsets = [16, 0], sizes = [8, 16], strides = [1, 1]} : vector<72x16xf32> to vector<8x16xf32>
    %cst_76 = arith.constant dense<0.000000e+00> : vector<8x256xf32>
    %155 = tpu.matmul %154, %153, %cst_76 {dimension_numbers = #tpu.dot_dimension_numbers<[1], [0], [0], [1], [0, 0, 1, 1], [], []>} : vector<8x16xf32>, vector<16x256xf32>, vector<8x256xf32> -> vector<8x256xf32>
    %156 = arith.addf %149, %155 : vector<8x256xf32>
    %c1_i32 = arith.constant 1 : i32
    %157 = tpu.dynamic_rotate %45 by %c1_i32 dim 1 : vector<16x256xf32>, i32 -> vector<16x256xf32>
    %c3_77 = arith.constant 3 : index
    %c0_78 = arith.constant 0 : index
    %158 = vector.load %arg3[%c3_77, %c0_78] : memref<9x256xf32, #tpu.memory_space<vmem>>, vector<1x256xf32>
    %159 = vector.broadcast %158 : vector<1x256xf32> to vector<16x256xf32>
    %160 = arith.mulf %157, %159 : vector<16x256xf32>
    %161 = vector.extract_strided_slice %130 {offsets = [24, 0], sizes = [8, 16], strides = [1, 1]} : vector<72x16xf32> to vector<8x16xf32>
    %cst_79 = arith.constant dense<0.000000e+00> : vector<8x256xf32>
    %162 = tpu.matmul %161, %160, %cst_79 {dimension_numbers = #tpu.dot_dimension_numbers<[1], [0], [0], [1], [0, 0, 1, 1], [], []>} : vector<8x16xf32>, vector<16x256xf32>, vector<8x256xf32> -> vector<8x256xf32>
    %163 = arith.addf %156, %162 : vector<8x256xf32>
    %164 = vector.extract_strided_slice %130 {offsets = [32, 0], sizes = [8, 16], strides = [1, 1]} : vector<72x16xf32> to vector<8x16xf32>
    %cst_80 = arith.constant dense<0.000000e+00> : vector<8x256xf32>
    %165 = tpu.matmul %164, %45, %cst_80 {dimension_numbers = #tpu.dot_dimension_numbers<[1], [0], [0], [1], [0, 0, 1, 1], [], []>} : vector<8x16xf32>, vector<16x256xf32>, vector<8x256xf32> -> vector<8x256xf32>
    %166 = arith.addf %163, %165 : vector<8x256xf32>
    %c255_i32 = arith.constant 255 : i32
    %167 = tpu.dynamic_rotate %45 by %c255_i32 dim 1 : vector<16x256xf32>, i32 -> vector<16x256xf32>
    %c5 = arith.constant 5 : index
    %c0_81 = arith.constant 0 : index
    %168 = vector.load %arg3[%c5, %c0_81] : memref<9x256xf32, #tpu.memory_space<vmem>>, vector<1x256xf32>
    %169 = vector.broadcast %168 : vector<1x256xf32> to vector<16x256xf32>
    %170 = arith.mulf %167, %169 : vector<16x256xf32>
    %171 = vector.extract_strided_slice %130 {offsets = [40, 0], sizes = [8, 16], strides = [1, 1]} : vector<72x16xf32> to vector<8x16xf32>
    %cst_82 = arith.constant dense<0.000000e+00> : vector<8x256xf32>
    %172 = tpu.matmul %171, %170, %cst_82 {dimension_numbers = #tpu.dot_dimension_numbers<[1], [0], [0], [1], [0, 0, 1, 1], [], []>} : vector<8x16xf32>, vector<16x256xf32>, vector<8x256xf32> -> vector<8x256xf32>
    %173 = arith.addf %166, %172 : vector<8x256xf32>
    %c241_i32 = arith.constant 241 : i32
    %174 = tpu.dynamic_rotate %45 by %c241_i32 dim 1 : vector<16x256xf32>, i32 -> vector<16x256xf32>
    %c6 = arith.constant 6 : index
    %c0_83 = arith.constant 0 : index
    %175 = vector.load %arg3[%c6, %c0_83] : memref<9x256xf32, #tpu.memory_space<vmem>>, vector<1x256xf32>
    %176 = vector.broadcast %175 : vector<1x256xf32> to vector<16x256xf32>
    %177 = arith.mulf %174, %176 : vector<16x256xf32>
    %178 = vector.extract_strided_slice %130 {offsets = [48, 0], sizes = [8, 16], strides = [1, 1]} : vector<72x16xf32> to vector<8x16xf32>
    %cst_84 = arith.constant dense<0.000000e+00> : vector<8x256xf32>
    %179 = tpu.matmul %178, %177, %cst_84 {dimension_numbers = #tpu.dot_dimension_numbers<[1], [0], [0], [1], [0, 0, 1, 1], [], []>} : vector<8x16xf32>, vector<16x256xf32>, vector<8x256xf32> -> vector<8x256xf32>
    %180 = arith.addf %173, %179 : vector<8x256xf32>
    %c240_i32 = arith.constant 240 : i32
    %181 = tpu.dynamic_rotate %45 by %c240_i32 dim 1 : vector<16x256xf32>, i32 -> vector<16x256xf32>
    %c7 = arith.constant 7 : index
    %c0_85 = arith.constant 0 : index
    %182 = vector.load %arg3[%c7, %c0_85] : memref<9x256xf32, #tpu.memory_space<vmem>>, vector<1x256xf32>
    %183 = vector.broadcast %182 : vector<1x256xf32> to vector<16x256xf32>
    %184 = arith.mulf %181, %183 : vector<16x256xf32>
    %185 = vector.extract_strided_slice %130 {offsets = [56, 0], sizes = [8, 16], strides = [1, 1]} : vector<72x16xf32> to vector<8x16xf32>
    %cst_86 = arith.constant dense<0.000000e+00> : vector<8x256xf32>
    %186 = tpu.matmul %185, %184, %cst_86 {dimension_numbers = #tpu.dot_dimension_numbers<[1], [0], [0], [1], [0, 0, 1, 1], [], []>} : vector<8x16xf32>, vector<16x256xf32>, vector<8x256xf32> -> vector<8x256xf32>
    %187 = arith.addf %180, %186 : vector<8x256xf32>
    %c239_i32 = arith.constant 239 : i32
    %188 = tpu.dynamic_rotate %45 by %c239_i32 dim 1 : vector<16x256xf32>, i32 -> vector<16x256xf32>
    %c8 = arith.constant 8 : index
    %c0_87 = arith.constant 0 : index
    %189 = vector.load %arg3[%c8, %c0_87] : memref<9x256xf32, #tpu.memory_space<vmem>>, vector<1x256xf32>
    %190 = vector.broadcast %189 : vector<1x256xf32> to vector<16x256xf32>
    %191 = arith.mulf %188, %190 : vector<16x256xf32>
    %192 = vector.extract_strided_slice %130 {offsets = [64, 0], sizes = [8, 16], strides = [1, 1]} : vector<72x16xf32> to vector<8x16xf32>
    %cst_88 = arith.constant dense<0.000000e+00> : vector<8x256xf32>
    %193 = tpu.matmul %192, %191, %cst_88 {dimension_numbers = #tpu.dot_dimension_numbers<[1], [0], [0], [1], [0, 0, 1, 1], [], []>} : vector<8x16xf32>, vector<16x256xf32>, vector<8x256xf32> -> vector<8x256xf32>
    %194 = arith.addf %187, %193 : vector<8x256xf32>
    %195 = vector.broadcast %134 : vector<8x1xf32> to vector<8x256xf32>
    %196 = arith.addf %194, %195 : vector<8x256xf32>
    %c0_89 = arith.constant 0 : index
    %c0_90 = arith.constant 0 : index
    %c0_91 = arith.constant 0 : index
    %197 = vector.load %arg14[%c0_89, %c0_90, %c0_91] : memref<1x8x256xf32, #tpu.memory_space<vmem>>, vector<1x8x256xf32>
    %198 = vector.shape_cast %197 : vector<1x8x256xf32> to vector<8x256xf32>
    %199 = vector.shape_cast %196 : vector<8x256xf32> to vector<1x8x256xf32>
    tpu.vector_store %arg14[%c0_89, %c0_90, %c0_91], %199 {strides = array<i32>} : memref<1x8x256xf32, #tpu.memory_space<vmem>>, vector<1x8x256xf32>,
    return
  }
  func.func @transform_0(%arg0: i32) -> (i32, i32, i32) {
    %c0_i32 = arith.constant 0 : i32
    %c0_i32_0 = arith.constant 0 : i32
    %c0_i32_1 = arith.constant 0 : i32
    return %arg0, %c0_i32, %c0_i32_0 : i32, i32, i32
  }
  func.func @transform_1(%arg0: i32) -> (i32, i32, i32) {
    %c0_i32 = arith.constant 0 : i32
    %c0_i32_0 = arith.constant 0 : i32
    %c0_i32_1 = arith.constant 0 : i32
    return %arg0, %c0_i32, %c0_i32_0 : i32, i32, i32
  }
  func.func @transform_2(%arg0: i32) -> (i32, i32) {
    %c0_i32 = arith.constant 0 : i32
    %c0_i32_0 = arith.constant 0 : i32
    %c0_i32_1 = arith.constant 0 : i32
    return %c0_i32, %c0_i32_0 : i32, i32
  }
  func.func @transform_3(%arg0: i32) -> (i32, i32) {
    %c0_i32 = arith.constant 0 : i32
    %c0_i32_0 = arith.constant 0 : i32
    %c0_i32_1 = arith.constant 0 : i32
    return %c0_i32, %c0_i32_0 : i32, i32
  }
  func.func @transform_4(%arg0: i32) -> (i32, i32) {
    %c0_i32 = arith.constant 0 : i32
    %c0_i32_0 = arith.constant 0 : i32
    %c0_i32_1 = arith.constant 0 : i32
    return %c0_i32, %c0_i32_0 : i32, i32
  }
  func.func @transform_5(%arg0: i32) -> (i32, i32) {
    %c0_i32 = arith.constant 0 : i32
    %c0_i32_0 = arith.constant 0 : i32
    %c0_i32_1 = arith.constant 0 : i32
    return %c0_i32, %c0_i32_0 : i32, i32
  }
  func.func @transform_6(%arg0: i32) -> (i32, i32) {
    %c0_i32 = arith.constant 0 : i32
    %c0_i32_0 = arith.constant 0 : i32
    %c0_i32_1 = arith.constant 0 : i32
    return %c0_i32, %c0_i32_0 : i32, i32
  }
  func.func @transform_7(%arg0: i32) -> (i32, i32) {
    %c0_i32 = arith.constant 0 : i32
    %c0_i32_0 = arith.constant 0 : i32
    %c0_i32_1 = arith.constant 0 : i32
    return %c0_i32, %c0_i32_0 : i32, i32
  }
  func.func @transform_8(%arg0: i32) -> (i32, i32) {
    %c0_i32 = arith.constant 0 : i32
    %c0_i32_0 = arith.constant 0 : i32
    %c0_i32_1 = arith.constant 0 : i32
    return %c0_i32, %c0_i32_0 : i32, i32
  }
  func.func @transform_9(%arg0: i32) -> (i32, i32) {
    %c0_i32 = arith.constant 0 : i32
    %c0_i32_0 = arith.constant 0 : i32
    %c0_i32_1 = arith.constant 0 : i32
    return %c0_i32, %c0_i32_0 : i32, i32
  }
  func.func @transform_10(%arg0: i32) -> (i32, i32) {
    %c0_i32 = arith.constant 0 : i32
    %c0_i32_0 = arith.constant 0 : i32
    %c0_i32_1 = arith.constant 0 : i32
    return %c0_i32, %c0_i32_0 : i32, i32
  }
  func.func @transform_11(%arg0: i32) -> (i32, i32, i32) {
    %c0_i32 = arith.constant 0 : i32
    %c0_i32_0 = arith.constant 0 : i32
    %c0_i32_1 = arith.constant 0 : i32
    %c0_i32_2 = arith.constant 0 : i32
    return %c0_i32, %c0_i32_0, %c0_i32_1 : i32, i32, i32
  }
  func.func @transform_12(%arg0: i32) -> (i32, i32) {
    %c0_i32 = arith.constant 0 : i32
    %c0_i32_0 = arith.constant 0 : i32
    %c0_i32_1 = arith.constant 0 : i32
    return %c0_i32, %c0_i32_0 : i32, i32
  }
  func.func @transform_13(%arg0: i32) -> (i32, i32, i32) {
    %c0_i32 = arith.constant 0 : i32
    %c0_i32_0 = arith.constant 0 : i32
    %c0_i32_1 = arith.constant 0 : i32
    return %arg0, %c0_i32, %c0_i32_0 : i32, i32, i32
  }
  func.func @transform_14(%arg0: i32) -> (i32, i32, i32) {
    %c0_i32 = arith.constant 0 : i32
    %c0_i32_0 = arith.constant 0 : i32
    %c0_i32_1 = arith.constant 0 : i32
    return %arg0, %c0_i32, %c0_i32_0 : i32, i32, i32
  }
}

</mosaic_0001>

<llo_original>
// kernel: _dynconv_forward.1
$region0: #{_dynconv_forward.1}
  #allocation0 [shape = 'u32[]', space=smem, size = 0x4, offset = 0x4, fixed_abs, tag = 'smem constant byte address 0x4 - core index']
  #allocation1 [shape = 'u32[144,128]{1,0:T(1,128)}', space=vmem, size = 0x12000, scoped, tag = 'internal scratch']
  %s0 = inlined_call_operand.vmem [shape: f32[2,27,256], index: 0, kind: input, shape index: {}]
  %s1 = inlined_call_operand.vmem [shape: f32[2,16,256], index: 1, kind: input, shape index: {}]
  %s2 = inlined_call_operand.vmem [shape: f32[9,256], index: 2, kind: input, shape index: {}]
  %s3 = inlined_call_operand.vmem [shape: f32[4,27], index: 3, kind: input, shape index: {}]
  %s4 = inlined_call_operand.vmem [shape: f32[4,1], index: 4, kind: input, shape index: {}]
  %s5 = inlined_call_operand.vmem [shape: f32[4,1], index: 5, kind: input, shape index: {}]
  %s6 = inlined_call_operand.vmem [shape: f32[4,1], index: 6, kind: input, shape index: {}]
  %s7 = inlined_call_operand.vmem [shape: f32[4,16], index: 7, kind: input, shape index: {}]
  %s8 = inlined_call_operand.vmem [shape: f32[4,1], index: 8, kind: input, shape index: {}]
  %s9 = inlined_call_operand.vmem [shape: f32[4,4], index: 9, kind: input, shape index: {}]
  %s10 = inlined_call_operand.vmem [shape: f32[4,1], index: 10, kind: input, shape index: {}]
  %s11 = inlined_call_operand.vmem [shape: f32[4,72,16], index: 11, kind: input, shape index: {}]
  %s12 = inlined_call_operand.vmem [shape: f32[8,4], index: 12, kind: input, shape index: {}]
  %s13 = inlined_call_operand.vmem [shape: f32[2,8,256], index: 13, kind: output, shape index: {0}]
  %s14 = inlined_call_operand.vmem [shape: f32[2,4,1], index: 14, kind: output, shape index: {1}]
  %15 = xla_tuple %s13, %s14
  %s16 = sld [smem:[#allocation0]]
  $region93: #{_dynconv_forward.1} parent=0
    _
  %s18 = ssub.s32 1, %s16
  %s19 = scalar_select 0, %s18, %s16
  loop: start=0, step=1, limit=4
  $region2: #{_dynconv_forward.1} parent=0 // loop_pre_header
    _
  $region3: #{_dynconv_forward.1} parent=0 // loop_header
    %s21 = sphi 0, %s25
    %p22 = scmp.ge.s32.totalorder %s21, 4
    %s31 = sphi 0, %s33
    %s34 = sphi 0, %s31
    %s35 = sphi 0, %s34
    %s51 = sphi 0, %s35
    %s57 = sphi 0, %s59
    %s60 = sphi 0, %s57
    %s61 = sphi 0, %s60
    %s77 = sphi 0, %s61
    %s81 = sphi 0, %s81
    %s83 = sphi 0, %s81
    %s84 = sphi 0, %s83
    %s98 = sphi 0, %s84
    %s102 = sphi 0, %s102
    %s104 = sphi 0, %s102
    %s105 = sphi 0, %s104
    %s119 = sphi 0, %s105
    %s123 = sphi 0, %s123
    %s125 = sphi 0, %s123
    %s126 = sphi 0, %s125
    %s140 = sphi 0, %s126
    %s144 = sphi 0, %s144
    %s146 = sphi 0, %s144
    %s147 = sphi 0, %s146
    %s161 = sphi 0, %s147
    %s165 = sphi 0, %s165
    %s167 = sphi 0, %s165
    %s168 = sphi 0, %s167
    %s182 = sphi 0, %s168
    %s186 = sphi 0, %s186
    %s188 = sphi 0, %s186
    %s189 = sphi 0, %s188
    %s203 = sphi 0, %s189
    %s207 = sphi 0, %s207
    %s209 = sphi 0, %s207
    %s210 = sphi 0, %s209
    %s224 = sphi 0, %s210
    %s228 = sphi 0, %s228
    %s230 = sphi 0, %s228
    %s231 = sphi 0, %s230
    %s245 = sphi 0, %s231
    %s249 = sphi 0, %s249
    %s251 = sphi 0, %s249
    %s252 = sphi 0, %s251
    %s266 = sphi 0, %s252
    %s270 = sphi 0, %s270
    %s272 = sphi 0, %s270
    %s273 = sphi 0, %s272
    %s287 = sphi 0, %s273
    %s291 = sphi 0, %s291
    %s293 = sphi 0, %s291
    %s294 = sphi 0, %s293
    %s308 = sphi 0, %s294
    %s314 = sphi 0, %s316
    %s317 = sphi 0, %s314
    %s318 = sphi 0, %s317
    %s334 = sphi 0, %s318
    %s340 = sphi 0, %s342
    %s343 = sphi 0, %s340
    %s344 = sphi 0, %s343
    %s360 = sphi 0, %s344
  $region4: #{_dynconv_forward.1} parent=0 // loop_header_branch
    %24 = sbr.rel (%p22) target = $region8
  $region5: #{_dynconv_forward.1} parent=0 // loop_body
    %s26 = ssub.s32 %s21, 1
    %s27 = ssub.s32 %s21, 2
    %s28 = sadd.s32 %s21, 1
    %s29 = ssub.s32 %s21, %s28
    %p30 = scmp.eq.s32.totalorder %s29, 0
    %s32 = sadd.s32 %s31, 1
    %s33 = scalar_select %p30, %s31, %s32
    %p36 = pneg %p30
    %p37 = scmp.eq.s32.totalorder %s21, 1
    %p38 = por %p36, %p37
    %p39 = scmp.ne.s32.totalorder %s31, %s34
    %p40 = scmp.eq.s32.totalorder %s21, 0
    %p41 = por %p39, %p40
    %p42 = scmp.ne.s32.totalorder %s31, %s34
    %p43 = scmp.eq.s32.totalorder %s26, 1
    %p44 = por %p42, %p43
    %p45 = scmp.ne.s32.totalorder %s34, %s35
    %p46 = scmp.eq.s32.totalorder %s26, 0
    %p47 = por %p45, %p46
    %p48 = scmp.ne.s32.totalorder %s34, %s35
    %p49 = scmp.eq.s32.totalorder %s27, 1
    %p50 = por %p48, %p49
    %p52 = scmp.ne.s32.totalorder %s35, %s51
    %p53 = scmp.eq.s32.totalorder %s27, 0
    %p54 = por %p52, %p53
    %s55 = ssub.s32 %s21, %s28
    %p56 = scmp.eq.s32.totalorder %s55, 0
    %s58 = sadd.s32 %s57, 1
    %s59 = scalar_select %p56, %s57, %s58
    %p62 = pneg %p56
    %p63 = scmp.eq.s32.totalorder %s21, 1
    %p64 = por %p62, %p63
    %p65 = scmp.ne.s32.totalorder %s57, %s60
    %p66 = scmp.eq.s32.totalorder %s21, 0
    %p67 = por %p65, %p66
    %p68 = scmp.ne.s32.totalorder %s57, %s60
    %p69 = scmp.eq.s32.totalorder %s26, 1
    %p70 = por %p68, %p69
    %p71 = scmp.ne.s32.totalorder %s60, %s61
    %p72 = scmp.eq.s32.totalorder %s26, 0
    %p73 = por %p71, %p72
    %p74 = scmp.ne.s32.totalorder %s60, %s61
    %p75 = scmp.eq.s32.totalorder %s27, 1
    %p76 = por %p74, %p75
    %p78 = scmp.ne.s32.totalorder %s61, %s77
    %p79 = scmp.eq.s32.totalorder %s27, 0
    %p80 = por %p78, %p79
    %s82 = sadd.s32 %s81, 1
    %p85 = scmp.eq.s32.totalorder %s21, 1
    %p86 = scmp.ne.s32.totalorder %s81, %s83
    %p87 = scmp.eq.s32.totalorder %s21, 0
    %p88 = por %p86, %p87
    %p89 = scmp.ne.s32.totalorder %s81, %s83
    %p90 = scmp.eq.s32.totalorder %s26, 1
    %p91 = por %p89, %p90
    %p92 = scmp.ne.s32.totalorder %s83, %s84
    %p93 = scmp.eq.s32.totalorder %s26, 0
    %p94 = por %p92, %p93
    %p95 = scmp.ne.s32.totalorder %s83, %s84
    %p96 = scmp.eq.s32.totalorder %s27, 1
    %p97 = por %p95, %p96
    %p99 = scmp.ne.s32.totalorder %s84, %s98
    %p100 = scmp.eq.s32.totalorder %s27, 0
    %p101 = por %p99, %p100
    %s103 = sadd.s32 %s102, 1
    %p106 = scmp.eq.s32.totalorder %s21, 1
    %p107 = scmp.ne.s32.totalorder %s102, %s104
    %p108 = scmp.eq.s32.totalorder %s21, 0
    %p109 = por %p107, %p108
    %p110 = scmp.ne.s32.totalorder %s102, %s104
    %p111 = scmp.eq.s32.totalorder %s26, 1
    %p112 = por %p110, %p111
    %p113 = scmp.ne.s32.totalorder %s104, %s105
    %p114 = scmp.eq.s32.totalorder %s26, 0
    %p115 = por %p113, %p114
    %p116 = scmp.ne.s32.totalorder %s104, %s105
    %p117 = scmp.eq.s32.totalorder %s27, 1
    %p118 = por %p116, %p117
    %p120 = scmp.ne.s32.totalorder %s105, %s119
    %p121 = scmp.eq.s32.totalorder %s27, 0
    %p122 = por %p120, %p121
    %s124 = sadd.s32 %s123, 1
    %p127 = scmp.eq.s32.totalorder %s21, 1
    %p128 = scmp.ne.s32.totalorder %s123, %s125
    %p129 = scmp.eq.s32.totalorder %s21, 0
    %p130 = por %p128, %p129
    %p131 = scmp.ne.s32.totalorder %s123, %s125
    %p132 = scmp.eq.s32.totalorder %s26, 1
    %p133 = por %p131, %p132
    %p134 = scmp.ne.s32.totalorder %s125, %s126
    %p135 = scmp.eq.s32.totalorder %s26, 0
    %p136 = por %p134, %p135
    %p137 = scmp.ne.s32.totalorder %s125, %s126
    %p138 = scmp.eq.s32.totalorder %s27, 1
    %p139 = por %p137, %p138
    %p141 = scmp.ne.s32.totalorder %s126, %s140
    %p142 = scmp.eq.s32.totalorder %s27, 0
    %p143 = por %p141, %p142
    %s145 = sadd.s32 %s144, 1
    %p148 = scmp.eq.s32.totalorder %s21, 1
    %p149 = scmp.ne.s32.totalorder %s144, %s146
    %p150 = scmp.eq.s32.totalorder %s21, 0
    %p151 = por %p149, %p150
    %p152 = scmp.ne.s32.totalorder %s144, %s146
    %p153 = scmp.eq.s32.totalorder %s26, 1
    %p154 = por %p152, %p153
    %p155 = scmp.ne.s32.totalorder %s146, %s147
    %p156 = scmp.eq.s32.totalorder %s26, 0
    %p157 = por %p155, %p156
    %p158 = scmp.ne.s32.totalorder %s146, %s147
    %p159 = scmp.eq.s32.totalorder %s27, 1
    %p160 = por %p158, %p159
    %p162 = scmp.ne.s32.totalorder %s147, %s161
    %p163 = scmp.eq.s32.totalorder %s27, 0
    %p164 = por %p162, %p163
    %s166 = sadd.s32 %s165, 1
    %p169 = scmp.eq.s32.totalorder %s21, 1
    %p170 = scmp.ne.s32.totalorder %s165, %s167
    %p171 = scmp.eq.s32.totalorder %s21, 0
    %p172 = por %p170, %p171
    %p173 = scmp.ne.s32.totalorder %s165, %s167
    %p174 = scmp.eq.s32.totalorder %s26, 1
    %p175 = por %p173, %p174
    %p176 = scmp.ne.s32.totalorder %s167, %s168
    %p177 = scmp.eq.s32.totalorder %s26, 0
    %p178 = por %p176, %p177
    %p179 = scmp.ne.s32.totalorder %s167, %s168
    %p180 = scmp.eq.s32.totalorder %s27, 1
    %p181 = por %p179, %p180
    %p183 = scmp.ne.s32.totalorder %s168, %s182
    %p184 = scmp.eq.s32.totalorder %s27, 0
    %p185 = por %p183, %p184
    %s187 = sadd.s32 %s186, 1
    %p190 = scmp.eq.s32.totalorder %s21, 1
    %p191 = scmp.ne.s32.totalorder %s186, %s188
    %p192 = scmp.eq.s32.totalorder %s21, 0
    %p193 = por %p191, %p192
    %p194 = scmp.ne.s32.totalorder %s186, %s188
    %p195 = scmp.eq.s32.totalorder %s26, 1
    %p196 = por %p194, %p195
    %p197 = scmp.ne.s32.totalorder %s188, %s189
    %p198 = scmp.eq.s32.totalorder %s26, 0
    %p199 = por %p197, %p198
    %p200 = scmp.ne.s32.totalorder %s188, %s189
    %p201 = scmp.eq.s32.totalorder %s27, 1
    %p202 = por %p200, %p201
    %p204 = scmp.ne.s32.totalorder %s189, %s203
    %p205 = scmp.eq.s32.totalorder %s27, 0
    %p206 = por %p204, %p205
    %s208 = sadd.s32 %s207, 1
    %p211 = scmp.eq.s32.totalorder %s21, 1
    %p212 = scmp.ne.s32.totalorder %s207, %s209
    %p213 = scmp.eq.s32.totalorder %s21, 0
    %p214 = por %p212, %p213
    %p215 = scmp.ne.s32.totalorder %s207, %s209
    %p216 = scmp.eq.s32.totalorder %s26, 1
    %p217 = por %p215, %p216
    %p218 = scmp.ne.s32.totalorder %s209, %s210
    %p219 = scmp.eq.s32.totalorder %s26, 0
    %p220 = por %p218, %p219
    %p221 = scmp.ne.s32.totalorder %s209, %s210
    %p222 = scmp.eq.s32.totalorder %s27, 1
    %p223 = por %p221, %p222
    %p225 = scmp.ne.s32.totalorder %s210, %s224
    %p226 = scmp.eq.s32.totalorder %s27, 0
    %p227 = por %p225, %p226
    %s229 = sadd.s32 %s228, 1
    %p232 = scmp.eq.s32.totalorder %s21, 1
    %p233 = scmp.ne.s32.totalorder %s228, %s230
    %p234 = scmp.eq.s32.totalorder %s21, 0
    %p235 = por %p233, %p234
    %p236 = scmp.ne.s32.totalorder %s228, %s230
    %p237 = scmp.eq.s32.totalorder %s26, 1
    %p238 = por %p236, %p237
    %p239 = scmp.ne.s32.totalorder %s230, %s231
    %p240 = scmp.eq.s32.totalorder %s26, 0
    %p241 = por %p239, %p240
    %p242 = scmp.ne.s32.totalorder %s230, %s231
    %p243 = scmp.eq.s32.totalorder %s27, 1
    %p244 = por %p242, %p243
    %p246 = scmp.ne.s32.totalorder %s231, %s245
    %p247 = scmp.eq.s32.totalorder %s27, 0
    %p248 = por %p246, %p247
    %s250 = sadd.s32 %s249, 1
    %p253 = scmp.eq.s32.totalorder %s21, 1
    %p254 = scmp.ne.s32.totalorder %s249, %s251
    %p255 = scmp.eq.s32.totalorder %s21, 0
    %p256 = por %p254, %p255
    %p257 = scmp.ne.s32.totalorder %s249, %s251
    %p258 = scmp.eq.s32.totalorder %s26, 1
    %p259 = por %p257, %p258
    %p260 = scmp.ne.s32.totalorder %s251, %s252
    %p261 = scmp.eq.s32.totalorder %s26, 0
    %p262 = por %p260, %p261
    %p263 = scmp.ne.s32.totalorder %s251, %s252
    %p264 = scmp.eq.s32.totalorder %s27, 1
    %p265 = por %p263, %p264
    %p267 = scmp.ne.s32.totalorder %s252, %s266
    %p268 = scmp.eq.s32.totalorder %s27, 0
    %p269 = por %p267, %p268
    %s271 = sadd.s32 %s270, 1
    %p274 = scmp.eq.s32.totalorder %s21, 1
    %p275 = scmp.ne.s32.totalorder %s270, %s272
    %p276 = scmp.eq.s32.totalorder %s21, 0
    %p277 = por %p275, %p276
    %p278 = scmp.ne.s32.totalorder %s270, %s272
    %p279 = scmp.eq.s32.totalorder %s26, 1
    %p280 = por %p278, %p279
    %p281 = scmp.ne.s32.totalorder %s272, %s273
    %p282 = scmp.eq.s32.totalorder %s26, 0
    %p283 = por %p281, %p282
    %p284 = scmp.ne.s32.totalorder %s272, %s273
    %p285 = scmp.eq.s32.totalorder %s27, 1
    %p286 = por %p284, %p285
    %p288 = scmp.ne.s32.totalorder %s273, %s287
    %p289 = scmp.eq.s32.totalorder %s27, 0
    %p290 = por %p288, %p289
    %s292 = sadd.s32 %s291, 1
    %p295 = scmp.eq.s32.totalorder %s21, 1
    %p296 = scmp.ne.s32.totalorder %s291, %s293
    %p297 = scmp.eq.s32.totalorder %s21, 0
    %p298 = por %p296, %p297
    %p299 = scmp.ne.s32.totalorder %s291, %s293
    %p300 = scmp.eq.s32.totalorder %s26, 1
    %p301 = por %p299, %p300
    %p302 = scmp.ne.s32.totalorder %s293, %s294
    %p303 = scmp.eq.s32.totalorder %s26, 0
    %p304 = por %p302, %p303
    %p305 = scmp.ne.s32.totalorder %s293, %s294
    %p306 = scmp.eq.s32.totalorder %s27, 1
    %p307 = por %p305, %p306
    %p309 = scmp.ne.s32.totalorder %s294, %s308
    %p310 = scmp.eq.s32.totalorder %s27, 0
    %p311 = por %p309, %p310
    %s312 = ssub.s32 %s21, %s28
    %p313 = scmp.eq.s32.totalorder %s312, 0
    %s315 = sadd.s32 %s314, 1
    %s316 = scalar_select %p313, %s314, %s315
    %p319 = pneg %p313
    %p320 = scmp.eq.s32.totalorder %s21, 1
    %p321 = por %p319, %p320
    %p322 = scmp.ne.s32.totalorder %s314, %s317
    %p323 = scmp.eq.s32.totalorder %s21, 0
    %p324 = por %p322, %p323
    %p325 = scmp.ne.s32.totalorder %s314, %s317
    %p326 = scmp.eq.s32.totalorder %s26, 1
    %p327 = por %p325, %p326
    %p328 = scmp.ne.s32.totalorder %s317, %s318
    %p329 = scmp.eq.s32.totalorder %s26, 0
    %p330 = por %p328, %p329
    %p331 = scmp.ne.s32.totalorder %s317, %s318
    %p332 = scmp.eq.s32.totalorder %s27, 1
    %p333 = por %p331, %p332
    %p335 = scmp.ne.s32.totalorder %s318, %s334
    %p336 = scmp.eq.s32.totalorder %s27, 0
    %p337 = por %p335, %p336
    %s338 = ssub.s32 %s21, %s28
    %p339 = scmp.eq.s32.totalorder %s338, 0
    %s341 = sadd.s32 %s340, 1
    %s342 = scalar_select %p339, %s340, %s341
    %p345 = pneg %p339
    %p346 = scmp.eq.s32.totalorder %s21, 1
    %p347 = por %p345, %p346
    %p348 = scmp.ne.s32.totalorder %s340, %s343
    %p349 = scmp.eq.s32.totalorder %s21, 0
    %p350 = por %p348, %p349
    %p351 = scmp.ne.s32.totalorder %s340, %s343
    %p352 = scmp.eq.s32.totalorder %s26, 1
    %p353 = por %p351, %p352
    %p354 = scmp.ne.s32.totalorder %s343, %s344
    %p355 = scmp.eq.s32.totalorder %s26, 0
    %p356 = por %p354, %p355
    %p357 = scmp.ne.s32.totalorder %s343, %s344
    %p358 = scmp.eq.s32.totalorder %s27, 1
    %p359 = por %p357, %p358
    %p361 = scmp.ne.s32.totalorder %s344, %s360
    %p362 = scmp.eq.s32.totalorder %s27, 0
    %p363 = por %p361, %p362
    %p364 = scmp.le.s32.totalorder 1, %s21
    %p365 = scmp.lt.s32.totalorder %s21, 3
    %p366 = pnand %p364, %p365
    %p367 = pneg %p366
    // Predicated region
    $region9: #{_dynconv_forward.1} parent=5 // pred_check
      _
    $region10: #{_dynconv_forward.1} parent=5 // pred_check_branch
      %369 = sbr.rel (%p366) target = $region12
    $region11: #{_dynconv_forward.1} parent=5 // pred_region
      %s370 = ssub.s32 %s21, 1
      // Predicated region
      $region13: #{_dynconv_forward.1} parent=11 // pred_check
        %p371 = pneg %p94
      $region14: #{_dynconv_forward.1} parent=11 // pred_check_branch
        %373 = sbr.rel (%p371) target = $region16
      $region15: #{_dynconv_forward.1} parent=11 // pred_region
        _
      $region16: #{_dynconv_forward.1} parent=11 // pred_fallthru
        _
      // Predicated region
      $region17: #{_dynconv_forward.1} parent=11 // pred_check
        %p374 = pneg %p115
      $region18: #{_dynconv_forward.1} parent=11 // pred_check_branch
        %376 = sbr.rel (%p374) target = $region20
      $region19: #{_dynconv_forward.1} parent=11 // pred_region
        _
      $region20: #{_dynconv_forward.1} parent=11 // pred_fallthru
        _
      // Predicated region
      $region21: #{_dynconv_forward.1} parent=11 // pred_check
        %p377 = pneg %p136
      $region22: #{_dynconv_forward.1} parent=11 // pred_check_branch
        %379 = sbr.rel (%p377) target = $region24
      $region23: #{_dynconv_forward.1} parent=11 // pred_region
        _
      $region24: #{_dynconv_forward.1} parent=11 // pred_fallthru
        _
      // Predicated region
      $region25: #{_dynconv_forward.1} parent=11 // pred_check
        %p380 = pneg %p157
      $region26: #{_dynconv_forward.1} parent=11 // pred_check_branch
        %382 = sbr.rel (%p380) target = $region28
      $region27: #{_dynconv_forward.1} parent=11 // pred_region
        _
      $region28: #{_dynconv_forward.1} parent=11 // pred_fallthru
        _
      // Predicated region
      $region29: #{_dynconv_forward.1} parent=11 // pred_check
        %p383 = pneg %p178
      $region30: #{_dynconv_forward.1} parent=11 // pred_check_branch
        %385 = sbr.rel (%p383) target = $region32
      $region31: #{_dynconv_forward.1} parent=11 // pred_region
        _
      $region32: #{_dynconv_forward.1} parent=11 // pred_fallthru
        _
      // Predicated region
      $region33: #{_dynconv_forward.1} parent=11 // pred_check
        %p386 = pneg %p199
      $region34: #{_dynconv_forward.1} parent=11 // pred_check_branch
        %388 = sbr.rel (%p386) target = $region36
      $region35: #{_dynconv_forward.1} parent=11 // pred_region
        _
      $region36: #{_dynconv_forward.1} parent=11 // pred_fallthru
        _
      // Predicated region
      $region37: #{_dynconv_forward.1} parent=11 // pred_check
        %p389 = pneg %p220
      $region38: #{_dynconv_forward.1} parent=11 // pred_check_branch
        %391 = sbr.rel (%p389) target = $region40
      $region39: #{_dynconv_forward.1} parent=11 // pred_region
        _
      $region40: #{_dynconv_forward.1} parent=11 // pred_fallthru
        _
      // Predicated region
      $region41: #{_dynconv_forward.1} parent=11 // pred_check
        %p392 = pneg %p241
      $region42: #{_dynconv_forward.1} parent=11 // pred_check_branch
        %394 = sbr.rel (%p392) target = $region44
      $region43: #{_dynconv_forward.1} parent=11 // pred_region
        _
      $region44: #{_dynconv_forward.1} parent=11 // pred_fallthru
        _
      // Predicated region
      $region45: #{_dynconv_forward.1} parent=11 // pred_check
        %p395 = pneg %p262
      $region46: #{_dynconv_forward.1} parent=11 // pred_check_branch
        %397 = sbr.rel (%p395) target = $region48
      $region47: #{_dynconv_forward.1} parent=11 // pred_region
        _
      $region48: #{_dynconv_forward.1} parent=11 // pred_fallthru
        _
      // Predicated region
      $region49: #{_dynconv_forward.1} parent=11 // pred_check
        %p398 = pneg %p283
      $region50: #{_dynconv_forward.1} parent=11 // pred_check_branch
        %400 = sbr.rel (%p398) target = $region52
      $region51: #{_dynconv_forward.1} parent=11 // pred_region
        _
      $region52: #{_dynconv_forward.1} parent=11 // pred_fallthru
        _
      // Predicated region
      $region53: #{_dynconv_forward.1} parent=11 // pred_check
        %p401 = pneg %p304
      $region54: #{_dynconv_forward.1} parent=11 // pred_check_branch
        %403 = sbr.rel (%p401) target = $region56
      $region55: #{_dynconv_forward.1} parent=11 // pred_region
        _
      $region56: #{_dynconv_forward.1} parent=11 // pred_fallthru
        _
    $region12: #{_dynconv_forward.1} parent=5 // pred_fallthru
      _
    %p404 = scmp.lt.s32.totalorder %s21, 2
    // Predicated region
    $region57: #{_dynconv_forward.1} parent=5 // pred_check
      %p405 = pneg %p404
    $region58: #{_dynconv_forward.1} parent=5 // pred_check_branch
      %407 = sbr.rel (%p405) target = $region60
    $region59: #{_dynconv_forward.1} parent=5 // pred_region
      // Predicated region
      $region61: #{_dynconv_forward.1} parent=59 // pred_check
        %p408 = pneg %p41
      $region62: #{_dynconv_forward.1} parent=59 // pred_check_branch
        %410 = sbr.rel (%p408) target = $region64
      $region63: #{_dynconv_forward.1} parent=59 // pred_region
        %p411 = scmp.lt.s32.totalorder %s21, 1
        %s412 = scalar_select %p411, %s21, 1
        %s413 = smul.addr %s412, 8
        %s414 = smul.addr %s413, 8
        %s415 = scalar_lea.vmem %s0, %s414
      $region64: #{_dynconv_forward.1} parent=59 // pred_fallthru
        _
      // Predicated region
      $region65: #{_dynconv_forward.1} parent=59 // pred_check
        %p416 = pneg %p67
      $region66: #{_dynconv_forward.1} parent=59 // pred_check_branch
        %418 = sbr.rel (%p416) target = $region68
      $region67: #{_dynconv_forward.1} parent=59 // pred_region
        %p419 = scmp.lt.s32.totalorder %s21, 1
        %s420 = scalar_select %p419, %s21, 1
        %s421 = smul.addr %s420, 4
        %s422 = smul.addr %s421, 8
        %s423 = scalar_lea.vmem %s1, %s422
      $region68: #{_dynconv_forward.1} parent=59 // pred_fallthru
        _
    $region60: #{_dynconv_forward.1} parent=5 // pred_fallthru
      _
    %p424 = scmp.le.s32.totalorder 1, %s21
    %p425 = scmp.lt.s32.totalorder %s21, 3
    %p426 = pnand %p424, %p425
    %p427 = pneg %p426
    // Predicated region
    $region69: #{_dynconv_forward.1} parent=5 // pred_check
      _
    $region70: #{_dynconv_forward.1} parent=5 // pred_check_branch
      %429 = sbr.rel (%p426) target = $region72
    $region71: #{_dynconv_forward.1} parent=5 // pred_region
      %s430 = ssub.s32 %s21, 1
      %p431 = scmp.lt.s32.totalorder %s26, 1
      %s432 = scalar_select %p431, %s26, 1
      %s433 = smul.addr %s432, 8
      %s434 = smul.addr %s433, 8
      %s435 = scalar_lea.vmem %s0, %s434
      %p436 = pneg %p47
      %p437 = pneg %p44
      %p438 = scmp.lt.s32.totalorder %s26, 1
      %s439 = scalar_select %p438, %s26, 1
      %s440 = smul.addr %s439, 4
      %s441 = smul.addr %s440, 8
      %s442 = scalar_lea.vmem %s1, %s441
      %p443 = pneg %p73
      %p444 = pneg %p70
      %p445 = pneg %p94
      %p446 = pneg %p91
      %p447 = pneg %p115
      %p448 = pneg %p112
      %p449 = pneg %p136
      %p450 = pneg %p133
      %p451 = pneg %p157
      %p452 = pneg %p154
      %p453 = pneg %p178
      %p454 = pneg %p175
      %p455 = pneg %p199
      %p456 = pneg %p196
      %p457 = pneg %p220
      %p458 = pneg %p217
      %p459 = pneg %p241
      %p460 = pneg %p238
      %p461 = pneg %p262
      %p462 = pneg %p259
      %p463 = pneg %p283
      %p464 = pneg %p280
      %p465 = pneg %p304
      %p466 = pneg %p301
      %p467 = pneg %p330
      %p468 = pneg %p327
      %p469 = scmp.lt.s32.totalorder %s26, 1
      %s470 = scalar_select %p469, %s26, 1
      %s471 = smul.addr %s470, 2
      %s472 = smul.addr %s471, 8
      %s473 = scalar_lea.vmem %s13, %s472
      %p474 = pneg %p356
      %p475 = pneg %p353
      %p476 = scmp.lt.s32.totalorder %s26, 1
      %s477 = scalar_select %p476, %s26, 1
      %s478 = smul.addr %s477, 4
      %s479 = scalar_lea.vmem %s14, %s478
      %p480 = scmp.lt.s32.totalorder %s26, 1
      %s481 = scalar_select %p480, %s26, 1
      %s482 = smul.addr %s481, 8
      %s483 = smul.addr %s482, 8
      %s484 = scalar_lea.vmem %s0, %s483
      %p485 = scmp.lt.s32.totalorder %s26, 1
      %s486 = scalar_select %p485, %s26, 1
      %s487 = smul.addr %s486, 4
      %s488 = smul.addr %s487, 8
      %s489 = scalar_lea.vmem %s1, %s488
      %p490 = scmp.lt.s32.totalorder %s26, 1
      %s491 = scalar_select %p490, %s26, 1
      %s492 = smul.addr %s491, 2
      %s493 = smul.addr %s492, 8
      %s494 = scalar_lea.vmem %s13, %s493
      %p495 = scmp.lt.s32.totalorder %s26, 1
      %s496 = scalar_select %p495, %s26, 1
      %s497 = smul.addr %s496, 4
      %s498 = scalar_lea.vmem %s14, %s497
      %v499 = vld [vmem:[%s484] sm:$0xff]
      %v500 = vld [vmem:[%s484 + $0x8] sm:$0xff]
      %v501 = vld [vmem:[%s484 + $0x10] sm:$0xff]
      %v502 = vld [vmem:[%s484 + $0x18] sm:$0xff]
      %v503 = vld [vmem:[%s484 + $0x20] sm:$0xff]
      %v504 = vld [vmem:[%s484 + $0x28] sm:$0xff]
      %v505 = vld [vmem:[%s484 + $0x30] sm:$0x7]
      %v506 = vld [vmem:[%s484 + $0x38] sm:$0x7]
      %v507 = vld [vmem:[%s3] sm:$0xf]
      %v508 = vld [vmem:[%s4] sm:$0xf]
      %510 = vset.pattern.permute.xlu0 0
      %511 = vperm.xlu0 %510, %v508
      %v512 = vpop.permute.xlu0 %511
      %vm514 = vcmask 220160
      %v516 = vsel %vm514, %v507, 0
      %vm518 = vcmask 1042432
      %v520 = vsel %vm518, %v505, 0
      %v523 = vsel %vm518, %v506, 0
      %525 = vmatprep.subr.mxu0 0.0
      %526 = vmatpush1.msra.mxu0 0.0
      %527 = vmatprep.subr.mxu0 0.0
      %528 = vmatpush1.msra.mxu0 0.0
      %529 = vmatprep.subr.mxu0 0.0
      %530 = vmatpush1.msra.mxu0 0.0
      %531 = vmatprep.subr.mxu0 0.0
      %532 = vmatpush1.msra.mxu0 0.0
      %533 = vmatprep.subr.mxu0 0.0
      %534 = vmatpush1.msra.mxu0 0.0
      %535 = vmatprep.subr.mxu0 0.0
      %536 = vmatpush1.msra.mxu0 0.0
      %537 = vmatprep.subr.mxu0 0.0
      %538 = vmatpush1.msra.mxu0 0.0
      %539 = vmatprep.subr.mxu0 0.0
      %540 = vmatpush1.msra.mxu0 0.0
      %541 = vmatprep.subr.mxu0 0.0
      %542 = vmatpush1.msra.mxu0 0.0
      %543 = vmatprep.subr.mxu0 0.0
      %544 = vmatpush1.msra.mxu0 0.0
      %545 = vmatprep.subr.mxu0 0.0
      %546 = vmatpush1.msra.mxu0 0.0
      %547 = vmatprep.subr.mxu0 0.0
      %548 = vmatpush1.msra.mxu0 0.0
      %549 = vmatprep.subr.mxu0 %v523
      %550 = vmatpush1.msra.mxu0 %v520
      %551 = vmatprep.subr.mxu0 %v504
      %552 = vmatpush1.msra.mxu0 %v503
      %553 = vmatprep.subr.mxu0 %v502
      %554 = vmatpush1.msra.mxu0 %v501
      %555 = vmatprep.subr.mxu0 %v500
      %556 = vmatpush1.msra.mxu0 %v499
      %557 = vmatprep.subr.mxu0 0.0
      %558 = vmatpush2.msra.mxu0 0.0
      %559 = vmatprep.subr.mxu0 0.0
      %560 = vmatpush2.msra.mxu0 0.0
      %561 = vmatprep.subr.mxu0 0.0
      %562 = vmatpush2.msra.mxu0 0.0
      %563 = vmatprep.subr.mxu0 0.0
      %564 = vmatpush2.msra.mxu0 0.0
      %565 = vmatprep.subr.mxu0 0.0
      %566 = vmatpush2.msra.mxu0 0.0
      %567 = vmatprep.subr.mxu0 0.0
      %568 = vmatpush2.msra.mxu0 0.0
      %569 = vmatprep.subr.mxu0 0.0
      %570 = vmatpush2.msra.mxu0 0.0
      %571 = vmatprep.subr.mxu0 0.0
      %572 = vmatpush2.msra.mxu0 0.0
      %573 = vmatprep.subr.mxu0 0.0
      %574 = vmatpush2.msra.mxu0 0.0
      %575 = vmatprep.subr.mxu0 0.0
      %576 = vmatpush2.msra.mxu0 0.0
      %577 = vmatprep.subr.mxu0 0.0
      %578 = vmatpush2.msra.mxu0 0.0
      %579 = vmatprep.subr.mxu0 0.0
      %580 = vmatpush2.msra.mxu0 0.0
      %581 = vmatprep.subr.mxu0 0.0
      %582 = vmatpush2.msra.mxu0 0.0
      %583 = vmatprep.subr.mxu0 0.0
      %584 = vmatpush2.msra.mxu0 0.0
      %585 = vmatprep.subr.mxu0 0.0
      %586 = vmatpush2.msra.mxu0 0.0
      %587 = vmatprep.subr.mxu0 0.0
      %588 = vmatpush2.msra.mxu0 0.0
      %589 = vmatprep.mubr.f32.mxu0 0.0
      %590 = vmatmul.mubr.f32.gmra.mxu0 %v516
      %v591 = vpop.f32.mrf.mxu0
      %v592 = vadd.f32 %v512, %v591
      %v593 = vpop.f32.mrf.mxu0
      %v594 = vadd.f32 %v512, %v593
      %595 = vdwg.mxu0
      %vm596 = vcmask 1043456
      %v597 = vsel %vm596, %v592, 0.0
      %v598 = vsel %vm596, %v594, 0.0
      %v599 = vadd.f32 %v597, %v598
      %600 = vadd.xlane.f32.xlu0 %v599
      %v601 = vpop.xlane.xlu0 %600
      %v602 = vsel %vm596, %v601, 0.0
      %v603 = vrot.slane %v602, 4
      %v604 = vadd.f32 %v602, %v603
      %v605 = vrot.slane %v604, 2
      %v606 = vadd.f32 %v604, %v605
      %v607 = vrot.slane %v606, 1
      %v608 = vadd.f32 %v606, %v607
      %v609 = vmul.f32 %v592, %v592
      %v610 = vmul.f32 %v594, %v594
      %v611 = vsel %vm596, %v609, 0.0
      %v612 = vsel %vm596, %v610, 0.0
      %v613 = vadd.f32 %v611, %v612
      %614 = vadd.xlane.f32.xlu0 %v613
      %v615 = vpop.xlane.xlu0 %614
      %v616 = vsel %vm596, %v615, 0.0
      %v617 = vrot.slane %v616, 4
      %v618 = vadd.f32 %v616, %v617
      %v619 = vrot.slane %v618, 2
      %v620 = vadd.f32 %v618, %v619
      %v621 = vrot.slane %v620, 1
      %v622 = vadd.f32 %v620, %v621
      %v623 = vrcp.pop 1024.0
      %v624 = vmul.f32 %v608, %v623
      %v625 = vmul.f32 %v622, %v623
      %v626 = vmul.f32 %v624, %v624
      %v627 = vsub.f32 %v625, %v626
      %v628 = vsub.f32 %v592, %v624
      %v629 = vsub.f32 %v594, %v624
      %v630 = vadd.f32 %v627, 1e-05
      %v631 = vrsqrt.pop %v630
      %v632 = vmul.f32 %v628, %v631
      %v633 = vmul.f32 %v629, %v631
      %v634 = vld [vmem:[%s5] sm:$0xf]
      %636 = vset.pattern.permute.xlu0 0
      %637 = vperm.xlu0 %636, %v634
      %v638 = vpop.permute.xlu0 %637
      %v640 = vmul.f32 %v632, %v638
      %v641 = vmul.f32 %v633, %v638
      %v642 = vld [vmem:[%s6] sm:$0xf]
      %644 = vset.pattern.permute.xlu0 0
      %645 = vperm.xlu0 %644, %v642
      %v646 = vpop.permute.xlu0 %645
      %v648 = vadd.f32 %v640, %v646
      %v649 = vadd.f32 %v641, %v646
      %vm650 = vcmp.gt.f32.partialorder %v648, 0.0
      %vm651 = vcmp.gt.f32.partialorder %v649, 0.0
      %v652 = vmul.f32 %v648, 0.01
      %v653 = vmul.f32 %v649, 0.01
      %v654 = vsel %vm650, %v648, %v652
      %v655 = vsel %vm651, %v649, %v653
      %v656 = vsel %vm596, %v654, 0.0
      %v657 = vsel %vm596, %v655, 0.0
      %v658 = vadd.f32 %v656, %v657
      %659 = vadd.xlane.f32.xlu0 %v658
      %v660 = vpop.xlane.xlu0 %659
      %v661 = vrcp.pop 256.0
      %v662 = vmul.f32 %v660, %v661
      %v663 = vld [vmem:[%s489] sm:$0xff]
      %v664 = vld [vmem:[%s489 + $0x8] sm:$0xff]
      %v665 = vld [vmem:[%s489 + $0x10] sm:$0xff]
      %v666 = vld [vmem:[%s489 + $0x18] sm:$0xff]
      %v667 = vld [vmem:[%s7] sm:$0xf]
      %vm668 = vcmask 130048
      %v670 = vsel %vm668, %v667, 0
      %672 = vmatprep.subr.mxu0 0.0
      %673 = vmatpush1.msra.mxu0 0.0
      %674 = vmatprep.subr.mxu0 0.0
      %675 = vmatpush1.msra.mxu0 0.0
      %676 = vmatprep.subr.mxu0 0.0
      %677 = vmatpush1.msra.mxu0 0.0
      %678 = vmatprep.subr.mxu0 0.0
      %679 = vmatpush1.msra.mxu0 0.0
      %680 = vmatprep.subr.mxu0 0.0
      %681 = vmatpush1.msra.mxu0 0.0
      %682 = vmatprep.subr.mxu0 0.0
      %683 = vmatpush1.msra.mxu0 0.0
      %684 = vmatprep.subr.mxu0 0.0
      %685 = vmatpush1.msra.mxu0 0.0
      %686 = vmatprep.subr.mxu0 0.0
      %687 = vmatpush1.msra.mxu0 0.0
      %688 = vmatprep.subr.mxu0 0.0
      %689 = vmatpush1.msra.mxu0 0.0
      %690 = vmatprep.subr.mxu0 0.0
      %691 = vmatpush1.msra.mxu0 0.0
      %692 = vmatprep.subr.mxu0 0.0
      %693 = vmatpush1.msra.mxu0 0.0
      %694 = vmatprep.subr.mxu0 0.0
      %695 = vmatpush1.msra.mxu0 0.0
      %696 = vmatprep.subr.mxu0 0.0
      %697 = vmatpush1.msra.mxu0 0.0
      %698 = vmatprep.subr.mxu0 0.0
      %699 = vmatpush1.msra.mxu0 0.0
      %700 = vmatprep.subr.mxu0 %v666
      %701 = vmatpush1.msra.mxu0 %v665
      %702 = vmatprep.subr.mxu0 %v664
      %703 = vmatpush1.msra.mxu0 %v663
      %704 = vmatprep.subr.mxu0 0.0
      %705 = vmatpush2.msra.mxu0 0.0
      %706 = vmatprep.subr.mxu0 0.0
      %707 = vmatpush2.msra.mxu0 0.0
      %708 = vmatprep.subr.mxu0 0.0
      %709 = vmatpush2.msra.mxu0 0.0
      %710 = vmatprep.subr.mxu0 0.0
      %711 = vmatpush2.msra.mxu0 0.0
      %712 = vmatprep.subr.mxu0 0.0
      %713 = vmatpush2.msra.mxu0 0.0
      %714 = vmatprep.subr.mxu0 0.0
      %715 = vmatpush2.msra.mxu0 0.0
      %716 = vmatprep.subr.mxu0 0.0
      %717 = vmatpush2.msra.mxu0 0.0
      %718 = vmatprep.subr.mxu0 0.0
      %719 = vmatpush2.msra.mxu0 0.0
      %720 = vmatprep.subr.mxu0 0.0
      %721 = vmatpush2.msra.mxu0 0.0
      %722 = vmatprep.subr.mxu0 0.0
      %723 = vmatpush2.msra.mxu0 0.0
      %724 = vmatprep.subr.mxu0 0.0
      %725 = vmatpush2.msra.mxu0 0.0
      %726 = vmatprep.subr.mxu0 0.0
      %727 = vmatpush2.msra.mxu0 0.0
      %728 = vmatprep.subr.mxu0 0.0
      %729 = vmatpush2.msra.mxu0 0.0
      %730 = vmatprep.subr.mxu0 0.0
      %731 = vmatpush2.msra.mxu0 0.0
      %732 = vmatprep.subr.mxu0 0.0
      %733 = vmatpush2.msra.mxu0 0.0
      %734 = vmatprep.subr.mxu0 0.0
      %735 = vmatpush2.msra.mxu0 0.0
      %736 = vmatprep.mubr.f32.mxu0 0.0
      %737 = vmatmul.mubr.f32.gmra.mxu0 %v670
      %v738 = vpop.f32.mrf.mxu0
      %v739 = vadd.f32 0.0, %v738
      %v740 = vpop.f32.mrf.mxu0
      %v741 = vadd.f32 0.0, %v740
      %742 = vdwg.mxu0
      %v743 = vsel %vm596, %v739, 0.0
      %v744 = vsel %vm596, %v741, 0.0
      %v745 = vadd.f32 %v743, %v744
      %746 = vadd.xlane.f32.xlu0 %v745
      %v747 = vpop.xlane.xlu0 %746
      %v748 = vmul.f32 %v747, %v661
      %v749 = vld [vmem:[%s8] sm:$0xf]
      %v750 = vadd.f32 %v748, %v749
      %v751 = vadd.f32 %v750, %v662
      %vm752 = vcmp.gt.f32.partialorder %v751, 0.0
      %v753 = vmul.f32 %v751, 0.01
      %v754 = vsel %vm752, %v751, %v753
      %v755 = vld [vmem:[%s10] sm:$0xf]
      %v756 = vld [vmem:[%s9] sm:$0xf]
      %v757 = vlaneseq
      %v758 = vshrl.u32 %v757, 7
      %v759 = vsub.s32 0, %v758
      %v760 = vrot.slane %v754, %v759
      %v761 = vmul.f32 %v760, %v756
      %v762 = vadd.f32 %v755, %v761
      %v763 = vlaneseq
      %v764 = vshrl.u32 %v763, 7
      %v765 = vsub.s32 1, %v764
      %v766 = vrot.slane %v754, %v765
      %768 = vrot.lane.b32.xlu0 %v756, 127
      %v769 = vpop.permute.xlu0 %768
      %v771 = vmul.f32 %v766, %v769
      %v772 = vadd.f32 %v762, %v771
      %v773 = vlaneseq
      %v774 = vshrl.u32 %v773, 7
      %v775 = vsub.s32 2, %v774
      %v776 = vrot.slane %v754, %v775
      %777 = vrot.lane.b32.xlu0 %v756, 126
      %v778 = vpop.permute.xlu0 %777
      %v780 = vmul.f32 %v776, %v778
      %v781 = vadd.f32 %v772, %v780
      %v782 = vlaneseq
      %v783 = vshrl.u32 %v782, 7
      %v784 = vsub.s32 3, %v783
      %v785 = vrot.slane %v754, %v784
      %786 = vrot.lane.b32.xlu0 %v756, 125
      %v787 = vpop.permute.xlu0 %786
      %v789 = vmul.f32 %v785, %v787
      %v790 = vadd.f32 %v781, %v789
      %vm791 = vcmask 3072
      %v792 = vsel %vm791, %v790, -inf
      %v793 = vrot.slane %v792, 4
      %v794 = vmax.f32 %v792, %v793
      %v795 = vrot.slane %v794, 2
      %v796 = vmax.f32 %v794, %v795
      %v797 = vrot.slane %v796, 1
      %v798 = vmax.f32 %v796, %v797
      %v799 = vsub.f32 %v790, %v798
      %v800 = vmul.f32 %v799, 1.442695
      %v801 = vpow.pop %v800
      %v802 = vsel %vm791, %v801, 0.0
      %v803 = vrot.slane %v802, 4
      %v804 = vadd.f32 %v802, %v803
      %v805 = vrot.slane %v804, 2
      %v806 = vadd.f32 %v804, %v805
      %v807 = vrot.slane %v806, 1
      %v808 = vadd.f32 %v806, %v807
      %v809 = vrcp.pop %v808
      %v810 = vmul.f32 %v801, %v809
      %811 = vst.msk [vmem:[%s498] sm:$0xf] %vm791, %v810
      %v812 = vld [vmem:[%s11] sm:$0xff]
      %v813 = vld [vmem:[%s11 + $0x8] sm:$0xff]
      %v814 = vld [vmem:[%s11 + $0x10] sm:$0xff]
      %v815 = vld [vmem:[%s11 + $0x18] sm:$0xff]
      %v816 = vld [vmem:[%s11 + $0x20] sm:$0xff]
      %v817 = vld [vmem:[%s11 + $0x28] sm:$0xff]
      %v818 = vld [vmem:[%s11 + $0x30] sm:$0xff]
      %v819 = vld [vmem:[%s11 + $0x38] sm:$0xff]
      %v820 = vld [vmem:[%s11 + $0x40] sm:$0xff]
      %s822 = vtos %v810
      %v823 = vstv %s822
      %v825 = vmul.f32 %v823, %v812
      %v826 = vmul.f32 %v823, %v813
      %v827 = vmul.f32 %v823, %v814
      %v828 = vmul.f32 %v823, %v815
      %v829 = vmul.f32 %v823, %v816
      %v830 = vmul.f32 %v823, %v817
      %v831 = vmul.f32 %v823, %v818
      %v832 = vmul.f32 %v823, %v819
      %v833 = vmul.f32 %v823, %v820
      %v834 = vadd.f32 %v825, 0.0
      %v835 = vadd.f32 %v826, 0.0
      %v836 = vadd.f32 %v827, 0.0
      %v837 = vadd.f32 %v828, 0.0
      %v838 = vadd.f32 %v829, 0.0
      %v839 = vadd.f32 %v830, 0.0
      %v840 = vadd.f32 %v831, 0.0
      %v841 = vadd.f32 %v832, 0.0
      %v842 = vadd.f32 %v833, 0.0
      %v843 = vld [vmem:[%s12] sm:$0xff]
      %v844 = vlaneseq
      %v845 = vshrl.u32 %v844, 7
      %v846 = vsub.s32 0, %v845
      %v847 = vrot.slane %v810, %v846
      %v848 = vmul.f32 %v847, %v843
      %v849 = vadd.f32 %v848, 0.0
      %s850 = scalar_lea.vmem %s11, 72
      %v851 = vld [vmem:[%s850] sm:$0xff]
      %v852 = vld [vmem:[%s850 + $0x8] sm:$0xff]
      %v853 = vld [vmem:[%s850 + $0x10] sm:$0xff]
      %v854 = vld [vmem:[%s850 + $0x18] sm:$0xff]
      %v855 = vld [vmem:[%s850 + $0x20] sm:$0xff]
      %v856 = vld [vmem:[%s850 + $0x28] sm:$0xff]
      %v857 = vld [vmem:[%s850 + $0x30] sm:$0xff]
      %v858 = vld [vmem:[%s850 + $0x38] sm:$0xff]
      %v859 = vld [vmem:[%s850 + $0x40] sm:$0xff]
      %v860 = vrot.slane %v810, 1
      %s861 = vtos %v860
      %v862 = vstv %s861
      %v864 = vmul.f32 %v862, %v851
      %v865 = vmul.f32 %v862, %v852
      %v866 = vmul.f32 %v862, %v853
      %v867 = vmul.f32 %v862, %v854
      %v868 = vmul.f32 %v862, %v855
      %v869 = vmul.f32 %v862, %v856
      %v870 = vmul.f32 %v862, %v857
      %v871 = vmul.f32 %v862, %v858
      %v872 = vmul.f32 %v862, %v859
      %v873 = vadd.f32 %v834, %v864
      %v874 = vadd.f32 %v835, %v865
      %v875 = vadd.f32 %v836, %v866
      %v876 = vadd.f32 %v837, %v867
      %v877 = vadd.f32 %v838, %v868
      %v878 = vadd.f32 %v839, %v869
      %v879 = vadd.f32 %v840, %v870
      %v880 = vadd.f32 %v841, %v871
      %v881 = vadd.f32 %v842, %v872
      %v882 = vlaneseq
      %v883 = vshrl.u32 %v882, 7
      %v884 = vsub.s32 1, %v883
      %v885 = vrot.slane %v810, %v884
      %887 = vrot.lane.b32.xlu0 %v843, 127
      %v888 = vpop.permute.xlu0 %887
      %v890 = vmul.f32 %v885, %v888
      %v891 = vadd.f32 %v849, %v890
      %s892 = scalar_lea.vmem %s11, 144
      %v893 = vld [vmem:[%s892] sm:$0xff]
      %v894 = vld [vmem:[%s892 + $0x8] sm:$0xff]
      %v895 = vld [vmem:[%s892 + $0x10] sm:$0xff]
      %v896 = vld [vmem:[%s892 + $0x18] sm:$0xff]
      %v897 = vld [vmem:[%s892 + $0x20] sm:$0xff]
      %v898 = vld [vmem:[%s892 + $0x28] sm:$0xff]
      %v899 = vld [vmem:[%s892 + $0x30] sm:$0xff]
      %v900 = vld [vmem:[%s892 + $0x38] sm:$0xff]
      %v901 = vld [vmem:[%s892 + $0x40] sm:$0xff]
      %v902 = vrot.slane %v810, 2
      %s903 = vtos %v902
      %v904 = vstv %s903
      %v906 = vmul.f32 %v904, %v893
      %v907 = vmul.f32 %v904, %v894
      %v908 = vmul.f32 %v904, %v895
      %v909 = vmul.f32 %v904, %v896
      %v910 = vmul.f32 %v904, %v897
      %v911 = vmul.f32 %v904, %v898
      %v912 = vmul.f32 %v904, %v899
      %v913 = vmul.f32 %v904, %v900
      %v914 = vmul.f32 %v904, %v901
      %v915 = vadd.f32 %v873, %v906
      %v916 = vadd.f32 %v874, %v907
      %v917 = vadd.f32 %v875, %v908
      %v918 = vadd.f32 %v876, %v909
      %v919 = vadd.f32 %v877, %v910
      %v920 = vadd.f32 %v878, %v911
      %v921 = vadd.f32 %v879, %v912
      %v922 = vadd.f32 %v880, %v913
      %v923 = vadd.f32 %v881, %v914
      %v924 = vlaneseq
      %v925 = vshrl.u32 %v924, 7
      %v926 = vsub.s32 2, %v925
      %v927 = vrot.slane %v810, %v926
      %928 = vrot.lane.b32.xlu0 %v843, 126
      %v929 = vpop.permute.xlu0 %928
      %v931 = vmul.f32 %v927, %v929
      %v932 = vadd.f32 %v891, %v931
      %s933 = scalar_lea.vmem %s11, 216
      %v934 = vld [vmem:[%s933] sm:$0xff]
      %v935 = vld [vmem:[%s933 + $0x8] sm:$0xff]
      %v936 = vld [vmem:[%s933 + $0x10] sm:$0xff]
      %v937 = vld [vmem:[%s933 + $0x18] sm:$0xff]
      %v938 = vld [vmem:[%s933 + $0x20] sm:$0xff]
      %v939 = vld [vmem:[%s933 + $0x28] sm:$0xff]
      %v940 = vld [vmem:[%s933 + $0x30] sm:$0xff]
      %v941 = vld [vmem:[%s933 + $0x38] sm:$0xff]
      %v942 = vld [vmem:[%s933 + $0x40] sm:$0xff]
      %v943 = vrot.slane %v810, 3
      %s944 = vtos %v943
      %v945 = vstv %s944
      %v947 = vmul.f32 %v945, %v934
      %v948 = vmul.f32 %v945, %v935
      %v949 = vmul.f32 %v945, %v936
      %v950 = vmul.f32 %v945, %v937
      %v951 = vmul.f32 %v945, %v938
      %v952 = vmul.f32 %v945, %v939
      %v953 = vmul.f32 %v945, %v940
      %v954 = vmul.f32 %v945, %v941
      %v955 = vmul.f32 %v945, %v942
      %v956 = vadd.f32 %v915, %v947
      %v957 = vadd.f32 %v916, %v948
      %v958 = vadd.f32 %v917, %v949
      %v959 = vadd.f32 %v918, %v950
      %v960 = vadd.f32 %v919, %v951
      %v961 = vadd.f32 %v920, %v952
      %v962 = vadd.f32 %v921, %v953
      %v963 = vadd.f32 %v922, %v954
      %v964 = vadd.f32 %v923, %v955
      %v965 = vlaneseq
      %v966 = vshrl.u32 %v965, 7
      %v967 = vsub.s32 3, %v966
      %v968 = vrot.slane %v810, %v967
      %969 = vrot.lane.b32.xlu0 %v843, 125
      %v970 = vpop.permute.xlu0 %969
      %v972 = vmul.f32 %v968, %v970
      %v973 = vadd.f32 %v932, %v972
      %974 = vrot.lane.b32.xlu0 %v663, 17
      %v975 = vpop.permute.xlu0 %974
      %976 = vrot.lane.b32.xlu0 %v665, 17
      %v977 = vpop.permute.xlu0 %976
      %978 = vrot.lane.b32.xlu0 %v664, 17
      %v979 = vpop.permute.xlu0 %978
      %980 = vrot.lane.b32.xlu0 %v666, 17
      %v981 = vpop.permute.xlu0 %980
      %v982 = vlaneseq
      %v983 = vand.u32 %v982, 127
      %vm984 = vcmp.lt.s32.totalorder %v983, 17
      %v985 = vsel %vm984, %v975, %v979
      %v986 = vsel %vm984, %v977, %v981
      %v987 = vsel %vm984, %v979, %v975
      %v988 = vsel %vm984, %v981, %v977
      %v989 = vld [vmem:[%s2] ss:$8 sm:$0x3]
      %v991 = vlaneseq
      %v992 = vshrl.u32 %v991, 7
      %v993 = vsub.s32 0, %v992
      %v994 = vrot.slane %v989, %v993
      %v995 = vlaneseq
      %v996 = vshrl.u32 %v995, 7
      %v997 = vsub.s32 1, %v996
      %v998 = vrot.slane %v989, %v997
      %v1001 = vmul.f32 %v987, %v994
      %v1002 = vmul.f32 %v985, %v998
      %v1003 = vmul.f32 %v988, %v994
      %v1004 = vmul.f32 %v986, %v998
      %1005 = vrot.lane.b32.xlu0 %v663, 16
      %v1006 = vpop.permute.xlu0 %1005
      %1007 = vrot.lane.b32.xlu0 %v665, 16
      %v1008 = vpop.permute.xlu0 %1007
      %1009 = vrot.lane.b32.xlu0 %v664, 16
      %v1010 = vpop.permute.xlu0 %1009
      %1011 = vrot.lane.b32.xlu0 %v666, 16
      %v1012 = vpop.permute.xlu0 %1011
      %vm1013 = vcmp.lt.s32.totalorder %v983, 16
      %v1014 = vsel %vm1013, %v1006, %v1010
      %v1015 = vsel %vm1013, %v1008, %v1012
      %v1016 = vsel %vm1013, %v1010, %v1006
      %v1017 = vsel %vm1013, %v1012, %v1008
      %s1018 = scalar_lea.vmem %s2, 1
      %v1019 = vld [vmem:[%s1018] ss:$8 sm:$0x3]
      %v1021 = vlaneseq
      %v1022 = vshrl.u32 %v1021, 7
      %v1023 = vsub.s32 0, %v1022
      %v1024 = vrot.slane %v1019, %v1023
      %v1025 = vlaneseq
      %v1026 = vshrl.u32 %v1025, 7
      %v1027 = vsub.s32 1, %v1026
      %v1028 = vrot.slane %v1019, %v1027
      %v1031 = vmul.f32 %v1016, %v1024
      %v1032 = vmul.f32 %v1014, %v1028
      %v1033 = vmul.f32 %v1017, %v1024
      %v1034 = vmul.f32 %v1015, %v1028
      %v1036 = vsel %vm668, %v957, 0
      %1038 = vmatprep.subr.mxu0 0.0
      %1039 = vmatpush1.msra.mxu0 0.0
      %1040 = vmatprep.subr.mxu0 0.0
      %1041 = vmatpush1.msra.mxu0 0.0
      %1042 = vmatprep.subr.mxu0 0.0
      %1043 = vmatpush1.msra.mxu0 0.0
      %1044 = vmatprep.subr.mxu0 0.0
      %1045 = vmatpush1.msra.mxu0 0.0
      %1046 = vmatprep.subr.mxu0 0.0
      %1047 = vmatpush1.msra.mxu0 0.0
      %1048 = vmatprep.subr.mxu0 0.0
      %1049 = vmatpush1.msra.mxu0 0.0
      %1050 = vmatprep.subr.mxu0 0.0
      %1051 = vmatpush1.msra.mxu0 0.0
      %1052 = vmatprep.subr.mxu0 0.0
      %1053 = vmatpush1.msra.mxu0 0.0
      %1054 = vmatprep.subr.mxu0 0.0
      %1055 = vmatpush1.msra.mxu0 0.0
      %1056 = vmatprep.subr.mxu0 0.0
      %1057 = vmatpush1.msra.mxu0 0.0
      %1058 = vmatprep.subr.mxu0 0.0
      %1059 = vmatpush1.msra.mxu0 0.0
      %1060 = vmatprep.subr.mxu0 0.0
      %1061 = vmatpush1.msra.mxu0 0.0
      %1062 = vmatprep.subr.mxu0 0.0
      %1063 = vmatpush1.msra.mxu0 0.0
      %1064 = vmatprep.subr.mxu0 0.0
      %1065 = vmatpush1.msra.mxu0 0.0
      %1066 = vmatprep.subr.mxu0 %v1034
      %1067 = vmatpush1.msra.mxu0 %v1033
      %1068 = vmatprep.subr.mxu0 %v1032
      %1069 = vmatpush1.msra.mxu0 %v1031
      %1070 = vmatprep.subr.mxu0 0.0
      %1071 = vmatpush2.msra.mxu0 0.0
      %1072 = vmatprep.subr.mxu0 0.0
      %1073 = vmatpush2.msra.mxu0 0.0
      %1074 = vmatprep.subr.mxu0 0.0
      %1075 = vmatpush2.msra.mxu0 0.0
      %1076 = vmatprep.subr.mxu0 0.0
      %1077 = vmatpush2.msra.mxu0 0.0
      %1078 = vmatprep.subr.mxu0 0.0
      %1079 = vmatpush2.msra.mxu0 0.0
      %1080 = vmatprep.subr.mxu0 0.0
      %1081 = vmatpush2.msra.mxu0 0.0
      %1082 = vmatprep.subr.mxu0 0.0
      %1083 = vmatpush2.msra.mxu0 0.0
      %1084 = vmatprep.subr.mxu0 0.0
      %1085 = vmatpush2.msra.mxu0 0.0
      %1086 = vmatprep.subr.mxu0 0.0
      %1087 = vmatpush2.msra.mxu0 0.0
      %1088 = vmatprep.subr.mxu0 0.0
      %1089 = vmatpush2.msra.mxu0 0.0
      %1090 = vmatprep.subr.mxu0 0.0
      %1091 = vmatpush2.msra.mxu0 0.0
      %1092 = vmatprep.subr.mxu0 0.0
      %1093 = vmatpush2.msra.mxu0 0.0
      %1094 = vmatprep.subr.mxu0 0.0
      %1095 = vmatpush2.msra.mxu0 0.0
      %1096 = vmatprep.subr.mxu0 0.0
      %1097 = vmatpush2.msra.mxu0 0.0
      %1098 = vmatprep.subr.mxu0 0.0
      %1099 = vmatpush2.msra.mxu0 0.0
      %1100 = vmatprep.subr.mxu0 0.0
      %1101 = vmatpush2.msra.mxu0 0.0
      %1102 = vmatprep.mubr.f32.mxu0 0.0
      %1103 = vmatmul.mubr.f32.gmra.mxu0 %v1036
      %v1104 = vpop.f32.mrf.mxu0
      %v1105 = vadd.f32 0.0, %v1104
      %v1106 = vpop.f32.mrf.mxu0
      %v1107 = vadd.f32 0.0, %v1106
      %1108 = vdwg.mxu0
      %v1110 = vsel %vm668, %v956, 0
      %1112 = vmatprep.subr.mxu0 0.0
      %1113 = vmatpush1.msra.mxu0 0.0
      %1114 = vmatprep.subr.mxu0 0.0
      %1115 = vmatpush1.msra.mxu0 0.0
      %1116 = vmatprep.subr.mxu0 0.0
      %1117 = vmatpush1.msra.mxu0 0.0
      %1118 = vmatprep.subr.mxu0 0.0
      %1119 = vmatpush1.msra.mxu0 0.0
      %1120 = vmatprep.subr.mxu0 0.0
      %1121 = vmatpush1.msra.mxu0 0.0
      %1122 = vmatprep.subr.mxu0 0.0
      %1123 = vmatpush1.msra.mxu0 0.0
      %1124 = vmatprep.subr.mxu0 0.0
      %1125 = vmatpush1.msra.mxu0 0.0
      %1126 = vmatprep.subr.mxu0 0.0
      %1127 = vmatpush1.msra.mxu0 0.0
      %1128 = vmatprep.subr.mxu0 0.0
      %1129 = vmatpush1.msra.mxu0 0.0
      %1130 = vmatprep.subr.mxu0 0.0
      %1131 = vmatpush1.msra.mxu0 0.0
      %1132 = vmatprep.subr.mxu0 0.0
      %1133 = vmatpush1.msra.mxu0 0.0
      %1134 = vmatprep.subr.mxu0 0.0
      %1135 = vmatpush1.msra.mxu0 0.0
      %1136 = vmatprep.subr.mxu0 0.0
      %1137 = vmatpush1.msra.mxu0 0.0
      %1138 = vmatprep.subr.mxu0 0.0
      %1139 = vmatpush1.msra.mxu0 0.0
      %1140 = vmatprep.subr.mxu0 %v1004
      %1141 = vmatpush1.msra.mxu0 %v1003
      %1142 = vmatprep.subr.mxu0 %v1002
      %1143 = vmatpush1.msra.mxu0 %v1001
      %1144 = vmatprep.subr.mxu0 0.0
      %1145 = vmatpush2.msra.mxu0 0.0
      %1146 = vmatprep.subr.mxu0 0.0
      %1147 = vmatpush2.msra.mxu0 0.0
      %1148 = vmatprep.subr.mxu0 0.0
      %1149 = vmatpush2.msra.mxu0 0.0
      %1150 = vmatprep.subr.mxu0 0.0
      %1151 = vmatpush2.msra.mxu0 0.0
      %1152 = vmatprep.subr.mxu0 0.0
      %1153 = vmatpush2.msra.mxu0 0.0
      %1154 = vmatprep.subr.mxu0 0.0
      %1155 = vmatpush2.msra.mxu0 0.0
      %1156 = vmatprep.subr.mxu0 0.0
      %1157 = vmatpush2.msra.mxu0 0.0
      %1158 = vmatprep.subr.mxu0 0.0
      %1159 = vmatpush2.msra.mxu0 0.0
      %1160 = vmatprep.subr.mxu0 0.0
      %1161 = vmatpush2.msra.mxu0 0.0
      %1162 = vmatprep.subr.mxu0 0.0
      %1163 = vmatpush2.msra.mxu0 0.0
      %1164 = vmatprep.subr.mxu0 0.0
      %1165 = vmatpush2.msra.mxu0 0.0
      %1166 = vmatprep.subr.mxu0 0.0
      %1167 = vmatpush2.msra.mxu0 0.0
      %1168 = vmatprep.subr.mxu0 0.0
      %1169 = vmatpush2.msra.mxu0 0.0
      %1170 = vmatprep.subr.mxu0 0.0
      %1171 = vmatpush2.msra.mxu0 0.0
      %1172 = vmatprep.subr.mxu0 0.0
      %1173 = vmatpush2.msra.mxu0 0.0
      %1174 = vmatprep.subr.mxu0 0.0
      %1175 = vmatpush2.msra.mxu0 0.0
      %1176 = vmatprep.mubr.f32.mxu0 0.0
      %1177 = vmatmul.mubr.f32.gmra.mxu0 %v1110
      %v1178 = vpop.f32.mrf.mxu0
      %v1179 = vadd.f32 %v1105, %v1178
      %v1180 = vpop.f32.mrf.mxu0
      %v1181 = vadd.f32 %v1107, %v1180
      %1182 = vdwg.mxu0
      %1183 = vrot.lane.b32.xlu0 %v663, 15
      %v1184 = vpop.permute.xlu0 %1183
      %1185 = vrot.lane.b32.xlu0 %v665, 15
      %v1186 = vpop.permute.xlu0 %1185
      %1187 = vrot.lane.b32.xlu0 %v664, 15
      %v1188 = vpop.permute.xlu0 %1187
      %1189 = vrot.lane.b32.xlu0 %v666, 15
      %v1190 = vpop.permute.xlu0 %1189
      %vm1191 = vcmp.lt.s32.totalorder %v983, 15
      %v1192 = vsel %vm1191, %v1184, %v1188
      %v1193 = vsel %vm1191, %v1186, %v1190
      %v1194 = vsel %vm1191, %v1188, %v1184
      %v1195 = vsel %vm1191, %v1190, %v1186
      %s1196 = scalar_lea.vmem %s2, 2
      %v1197 = vld [vmem:[%s1196] ss:$8 sm:$0x3]
      %v1199 = vlaneseq
      %v1200 = vshrl.u32 %v1199, 7
      %v1201 = vsub.s32 0, %v1200
      %v1202 = vrot.slane %v1197, %v1201
      %v1203 = vlaneseq
      %v1204 = vshrl.u32 %v1203, 7
      %v1205 = vsub.s32 1, %v1204
      %v1206 = vrot.slane %v1197, %v1205
      %v1209 = vmul.f32 %v1194, %v1202
      %v1210 = vmul.f32 %v1192, %v1206
      %v1211 = vmul.f32 %v1195, %v1202
      %v1212 = vmul.f32 %v1193, %v1206
      %v1214 = vsel %vm668, %v958, 0
      %1216 = vmatprep.subr.mxu0 0.0
      %1217 = vmatpush1.msra.mxu0 0.0
      %1218 = vmatprep.subr.mxu0 0.0
      %1219 = vmatpush1.msra.mxu0 0.0
      %1220 = vmatprep.subr.mxu0 0.0
      %1221 = vmatpush1.msra.mxu0 0.0
      %1222 = vmatprep.subr.mxu0 0.0
      %1223 = vmatpush1.msra.mxu0 0.0
      %1224 = vmatprep.subr.mxu0 0.0
      %1225 = vmatpush1.msra.mxu0 0.0
      %1226 = vmatprep.subr.mxu0 0.0
      %1227 = vmatpush1.msra.mxu0 0.0
      %1228 = vmatprep.subr.mxu0 0.0
      %1229 = vmatpush1.msra.mxu0 0.0
      %1230 = vmatprep.subr.mxu0 0.0
      %1231 = vmatpush1.msra.mxu0 0.0
      %1232 = vmatprep.subr.mxu0 0.0
      %1233 = vmatpush1.msra.mxu0 0.0
      %1234 = vmatprep.subr.mxu0 0.0
      %1235 = vmatpush1.msra.mxu0 0.0
      %1236 = vmatprep.subr.mxu0 0.0
      %1237 = vmatpush1.msra.mxu0 0.0
      %1238 = vmatprep.subr.mxu0 0.0
      %1239 = vmatpush1.msra.mxu0 0.0
      %1240 = vmatprep.subr.mxu0 0.0
      %1241 = vmatpush1.msra.mxu0 0.0
      %1242 = vmatprep.subr.mxu0 0.0
      %1243 = vmatpush1.msra.mxu0 0.0
      %1244 = vmatprep.subr.mxu0 %v1212
      %1245 = vmatpush1.msra.mxu0 %v1211
      %1246 = vmatprep.subr.mxu0 %v1210
      %1247 = vmatpush1.msra.mxu0 %v1209
      %1248 = vmatprep.subr.mxu0 0.0
      %1249 = vmatpush2.msra.mxu0 0.0
      %1250 = vmatprep.subr.mxu0 0.0
      %1251 = vmatpush2.msra.mxu0 0.0
      %1252 = vmatprep.subr.mxu0 0.0
      %1253 = vmatpush2.msra.mxu0 0.0
      %1254 = vmatprep.subr.mxu0 0.0
      %1255 = vmatpush2.msra.mxu0 0.0
      %1256 = vmatprep.subr.mxu0 0.0
      %1257 = vmatpush2.msra.mxu0 0.0
      %1258 = vmatprep.subr.mxu0 0.0
      %1259 = vmatpush2.msra.mxu0 0.0
      %1260 = vmatprep.subr.mxu0 0.0
      %1261 = vmatpush2.msra.mxu0 0.0
      %1262 = vmatprep.subr.mxu0 0.0
      %1263 = vmatpush2.msra.mxu0 0.0
      %1264 = vmatprep.subr.mxu0 0.0
      %1265 = vmatpush2.msra.mxu0 0.0
      %1266 = vmatprep.subr.mxu0 0.0
      %1267 = vmatpush2.msra.mxu0 0.0
      %1268 = vmatprep.subr.mxu0 0.0
      %1269 = vmatpush2.msra.mxu0 0.0
      %1270 = vmatprep.subr.mxu0 0.0
      %1271 = vmatpush2.msra.mxu0 0.0
      %1272 = vmatprep.subr.mxu0 0.0
      %1273 = vmatpush2.msra.mxu0 0.0
      %1274 = vmatprep.subr.mxu0 0.0
      %1275 = vmatpush2.msra.mxu0 0.0
      %1276 = vmatprep.subr.mxu0 0.0
      %1277 = vmatpush2.msra.mxu0 0.0
      %1278 = vmatprep.subr.mxu0 0.0
      %1279 = vmatpush2.msra.mxu0 0.0
      %1280 = vmatprep.mubr.f32.mxu0 0.0
      %1281 = vmatmul.mubr.f32.gmra.mxu0 %v1214
      %v1282 = vpop.f32.mrf.mxu0
      %v1283 = vadd.f32 0.0, %v1282
      %v1284 = vpop.f32.mrf.mxu0
      %v1285 = vadd.f32 0.0, %v1284
      %1286 = vdwg.mxu0
      %v1287 = vadd.f32 %v1179, %v1283
      %v1288 = vadd.f32 %v1181, %v1285
      %1289 = vrot.lane.b32.xlu0 %v663, 1
      %v1290 = vpop.permute.xlu0 %1289
      %1291 = vrot.lane.b32.xlu0 %v665, 1
      %v1292 = vpop.permute.xlu0 %1291
      %1293 = vrot.lane.b32.xlu0 %v664, 1
      %v1294 = vpop.permute.xlu0 %1293
      %1295 = vrot.lane.b32.xlu0 %v666, 1
      %v1296 = vpop.permute.xlu0 %1295
      %vm1297 = vcmp.lt.s32.totalorder %v983, 1
      %v1298 = vsel %vm1297, %v1290, %v1294
      %v1299 = vsel %vm1297, %v1292, %v1296
      %v1300 = vsel %vm1297, %v1294, %v1290
      %v1301 = vsel %vm1297, %v1296, %v1292
      %s1302 = scalar_lea.vmem %s2, 3
      %v1303 = vld [vmem:[%s1302] ss:$8 sm:$0x3]
      %v1305 = vlaneseq
      %v1306 = vshrl.u32 %v1305, 7
      %v1307 = vsub.s32 0, %v1306
      %v1308 = vrot.slane %v1303, %v1307
      %v1309 = vlaneseq
      %v1310 = vshrl.u32 %v1309, 7
      %v1311 = vsub.s32 1, %v1310
      %v1312 = vrot.slane %v1303, %v1311
      %v1315 = vmul.f32 %v1300, %v1308
      %v1316 = vmul.f32 %v1298, %v1312
      %v1317 = vmul.f32 %v1301, %v1308
      %v1318 = vmul.f32 %v1299, %v1312
      %v1320 = vsel %vm668, %v959, 0
      %1322 = vmatprep.subr.mxu0 0.0
      %1323 = vmatpush1.msra.mxu0 0.0
      %1324 = vmatprep.subr.mxu0 0.0
      %1325 = vmatpush1.msra.mxu0 0.0
      %1326 = vmatprep.subr.mxu0 0.0
      %1327 = vmatpush1.msra.mxu0 0.0
      %1328 = vmatprep.subr.mxu0 0.0
      %1329 = vmatpush1.msra.mxu0 0.0
      %1330 = vmatprep.subr.mxu0 0.0
      %1331 = vmatpush1.msra.mxu0 0.0
      %1332 = vmatprep.subr.mxu0 0.0
      %1333 = vmatpush1.msra.mxu0 0.0
      %1334 = vmatprep.subr.mxu0 0.0
      %1335 = vmatpush1.msra.mxu0 0.0
      %1336 = vmatprep.subr.mxu0 0.0
      %1337 = vmatpush1.msra.mxu0 0.0
      %1338 = vmatprep.subr.mxu0 0.0
      %1339 = vmatpush1.msra.mxu0 0.0
      %1340 = vmatprep.subr.mxu0 0.0
      %1341 = vmatpush1.msra.mxu0 0.0
      %1342 = vmatprep.subr.mxu0 0.0
      %1343 = vmatpush1.msra.mxu0 0.0
      %1344 = vmatprep.subr.mxu0 0.0
      %1345 = vmatpush1.msra.mxu0 0.0
      %1346 = vmatprep.subr.mxu0 0.0
      %1347 = vmatpush1.msra.mxu0 0.0
      %1348 = vmatprep.subr.mxu0 0.0
      %1349 = vmatpush1.msra.mxu0 0.0
      %1350 = vmatprep.subr.mxu0 %v1318
      %1351 = vmatpush1.msra.mxu0 %v1317
      %1352 = vmatprep.subr.mxu0 %v1316
      %1353 = vmatpush1.msra.mxu0 %v1315
      %1354 = vmatprep.subr.mxu0 0.0
      %1355 = vmatpush2.msra.mxu0 0.0
      %1356 = vmatprep.subr.mxu0 0.0
      %1357 = vmatpush2.msra.mxu0 0.0
      %1358 = vmatprep.subr.mxu0 0.0
      %1359 = vmatpush2.msra.mxu0 0.0
      %1360 = vmatprep.subr.mxu0 0.0
      %1361 = vmatpush2.msra.mxu0 0.0
      %1362 = vmatprep.subr.mxu0 0.0
      %1363 = vmatpush2.msra.mxu0 0.0
      %1364 = vmatprep.subr.mxu0 0.0
      %1365 = vmatpush2.msra.mxu0 0.0
      %1366 = vmatprep.subr.mxu0 0.0
      %1367 = vmatpush2.msra.mxu0 0.0
      %1368 = vmatprep.subr.mxu0 0.0
      %1369 = vmatpush2.msra.mxu0 0.0
      %1370 = vmatprep.subr.mxu0 0.0
      %1371 = vmatpush2.msra.mxu0 0.0
      %1372 = vmatprep.subr.mxu0 0.0
      %1373 = vmatpush2.msra.mxu0 0.0
      %1374 = vmatprep.subr.mxu0 0.0
      %1375 = vmatpush2.msra.mxu0 0.0
      %1376 = vmatprep.subr.mxu0 0.0
      %1377 = vmatpush2.msra.mxu0 0.0
      %1378 = vmatprep.subr.mxu0 0.0
      %1379 = vmatpush2.msra.mxu0 0.0
      %1380 = vmatprep.subr.mxu0 0.0
      %1381 = vmatpush2.msra.mxu0 0.0
      %1382 = vmatprep.subr.mxu0 0.0
      %1383 = vmatpush2.msra.mxu0 0.0
      %1384 = vmatprep.subr.mxu0 0.0
      %1385 = vmatpush2.msra.mxu0 0.0
      %1386 = vmatprep.mubr.f32.mxu0 0.0
      %1387 = vmatmul.mubr.f32.gmra.mxu0 %v1320
      %v1388 = vpop.f32.mrf.mxu0
      %v1389 = vadd.f32 0.0, %v1388
      %v1390 = vpop.f32.mrf.mxu0
      %v1391 = vadd.f32 0.0, %v1390
      %1392 = vdwg.mxu0
      %v1393 = vadd.f32 %v1287, %v1389
      %v1394 = vadd.f32 %v1288, %v1391
      %v1396 = vsel %vm668, %v960, 0
      %1398 = vmatprep.subr.mxu0 0.0
      %1399 = vmatpush1.msra.mxu0 0.0
      %1400 = vmatprep.subr.mxu0 0.0
      %1401 = vmatpush1.msra.mxu0 0.0
      %1402 = vmatprep.subr.mxu0 0.0
      %1403 = vmatpush1.msra.mxu0 0.0
      %1404 = vmatprep.subr.mxu0 0.0
      %1405 = vmatpush1.msra.mxu0 0.0
      %1406 = vmatprep.subr.mxu0 0.0
      %1407 = vmatpush1.msra.mxu0 0.0
      %1408 = vmatprep.subr.mxu0 0.0
      %1409 = vmatpush1.msra.mxu0 0.0
      %1410 = vmatprep.subr.mxu0 0.0
      %1411 = vmatpush1.msra.mxu0 0.0
      %1412 = vmatprep.subr.mxu0 0.0
      %1413 = vmatpush1.msra.mxu0 0.0
      %1414 = vmatprep.subr.mxu0 0.0
      %1415 = vmatpush1.msra.mxu0 0.0
      %1416 = vmatprep.subr.mxu0 0.0
      %1417 = vmatpush1.msra.mxu0 0.0
      %1418 = vmatprep.subr.mxu0 0.0
      %1419 = vmatpush1.msra.mxu0 0.0
      %1420 = vmatprep.subr.mxu0 0.0
      %1421 = vmatpush1.msra.mxu0 0.0
      %1422 = vmatprep.subr.mxu0 0.0
      %1423 = vmatpush1.msra.mxu0 0.0
      %1424 = vmatprep.subr.mxu0 0.0
      %1425 = vmatpush1.msra.mxu0 0.0
      %1426 = vmatprep.subr.mxu0 %v666
      %1427 = vmatpush1.msra.mxu0 %v665
      %1428 = vmatprep.subr.mxu0 %v664
      %1429 = vmatpush1.msra.mxu0 %v663
      %1430 = vmatprep.subr.mxu0 0.0
      %1431 = vmatpush2.msra.mxu0 0.0
      %1432 = vmatprep.subr.mxu0 0.0
      %1433 = vmatpush2.msra.mxu0 0.0
      %1434 = vmatprep.subr.mxu0 0.0
      %1435 = vmatpush2.msra.mxu0 0.0
      %1436 = vmatprep.subr.mxu0 0.0
      %1437 = vmatpush2.msra.mxu0 0.0
      %1438 = vmatprep.subr.mxu0 0.0
      %1439 = vmatpush2.msra.mxu0 0.0
      %1440 = vmatprep.subr.mxu0 0.0
      %1441 = vmatpush2.msra.mxu0 0.0
      %1442 = vmatprep.subr.mxu0 0.0
      %1443 = vmatpush2.msra.mxu0 0.0
      %1444 = vmatprep.subr.mxu0 0.0
      %1445 = vmatpush2.msra.mxu0 0.0
      %1446 = vmatprep.subr.mxu0 0.0
      %1447 = vmatpush2.msra.mxu0 0.0
      %1448 = vmatprep.subr.mxu0 0.0
      %1449 = vmatpush2.msra.mxu0 0.0
      %1450 = vmatprep.subr.mxu0 0.0
      %1451 = vmatpush2.msra.mxu0 0.0
      %1452 = vmatprep.subr.mxu0 0.0
      %1453 = vmatpush2.msra.mxu0 0.0
      %1454 = vmatprep.subr.mxu0 0.0
      %1455 = vmatpush2.msra.mxu0 0.0
      %1456 = vmatprep.subr.mxu0 0.0
      %1457 = vmatpush2.msra.mxu0 0.0
      %1458 = vmatprep.subr.mxu0 0.0
      %1459 = vmatpush2.msra.mxu0 0.0
      %1460 = vmatprep.subr.mxu0 0.0
      %1461 = vmatpush2.msra.mxu0 0.0
      %1462 = vmatprep.mubr.f32.mxu0 0.0
      %1463 = vmatmul.mubr.f32.gmra.mxu0 %v1396
      %v1464 = vpop.f32.mrf.mxu0
      %v1465 = vadd.f32 0.0, %v1464
      %v1466 = vpop.f32.mrf.mxu0
      %v1467 = vadd.f32 0.0, %v1466
      %1468 = vdwg.mxu0
      %v1469 = vadd.f32 %v1393, %v1465
      %v1470 = vadd.f32 %v1394, %v1467
      %1471 = vrot.lane.b32.xlu0 %v663, 127
      %v1472 = vpop.permute.xlu0 %1471
      %1473 = vrot.lane.b32.xlu0 %v665, 127
      %v1474 = vpop.permute.xlu0 %1473
      %1475 = vrot.lane.b32.xlu0 %v664, 127
      %v1476 = vpop.permute.xlu0 %1475
      %1477 = vrot.lane.b32.xlu0 %v666, 127
      %v1478 = vpop.permute.xlu0 %1477
      %vm1479 = vcmp.lt.s32.totalorder %v983, 127
      %v1480 = vsel %vm1479, %v1472, %v1476
      %v1481 = vsel %vm1479, %v1474, %v1478
      %v1482 = vsel %vm1479, %v1476, %v1472
      %v1483 = vsel %vm1479, %v1478, %v1474
      %s1484 = scalar_lea.vmem %s2, 5
      %v1485 = vld [vmem:[%s1484] ss:$8 sm:$0x3]
      %v1487 = vlaneseq
      %v1488 = vshrl.u32 %v1487, 7
      %v1489 = vsub.s32 0, %v1488
      %v1490 = vrot.slane %v1485, %v1489
      %v1491 = vlaneseq
      %v1492 = vshrl.u32 %v1491, 7
      %v1493 = vsub.s32 1, %v1492
      %v1494 = vrot.slane %v1485, %v1493
      %v1497 = vmul.f32 %v1480, %v1490
      %v1498 = vmul.f32 %v1482, %v1494
      %v1499 = vmul.f32 %v1481, %v1490
      %v1500 = vmul.f32 %v1483, %v1494
      %v1502 = vsel %vm668, %v961, 0
      %1504 = vmatprep.subr.mxu0 0.0
      %1505 = vmatpush1.msra.mxu0 0.0
      %1506 = vmatprep.subr.mxu0 0.0
      %1507 = vmatpush1.msra.mxu0 0.0
      %1508 = vmatprep.subr.mxu0 0.0
      %1509 = vmatpush1.msra.mxu0 0.0
      %1510 = vmatprep.subr.mxu0 0.0
      %1511 = vmatpush1.msra.mxu0 0.0
      %1512 = vmatprep.subr.mxu0 0.0
      %1513 = vmatpush1.msra.mxu0 0.0
      %1514 = vmatprep.subr.mxu0 0.0
      %1515 = vmatpush1.msra.mxu0 0.0
      %1516 = vmatprep.subr.mxu0 0.0
      %1517 = vmatpush1.msra.mxu0 0.0
      %1518 = vmatprep.subr.mxu0 0.0
      %1519 = vmatpush1.msra.mxu0 0.0
      %1520 = vmatprep.subr.mxu0 0.0
      %1521 = vmatpush1.msra.mxu0 0.0
      %1522 = vmatprep.subr.mxu0 0.0
      %1523 = vmatpush1.msra.mxu0 0.0
      %1524 = vmatprep.subr.mxu0 0.0
      %1525 = vmatpush1.msra.mxu0 0.0
      %1526 = vmatprep.subr.mxu0 0.0
      %1527 = vmatpush1.msra.mxu0 0.0
      %1528 = vmatprep.subr.mxu0 0.0
      %1529 = vmatpush1.msra.mxu0 0.0
      %1530 = vmatprep.subr.mxu0 0.0
      %1531 = vmatpush1.msra.mxu0 0.0
      %1532 = vmatprep.subr.mxu0 %v1500
      %1533 = vmatpush1.msra.mxu0 %v1499
      %1534 = vmatprep.subr.mxu0 %v1498
      %1535 = vmatpush1.msra.mxu0 %v1497
      %1536 = vmatprep.subr.mxu0 0.0
      %1537 = vmatpush2.msra.mxu0 0.0
      %1538 = vmatprep.subr.mxu0 0.0
      %1539 = vmatpush2.msra.mxu0 0.0
      %1540 = vmatprep.subr.mxu0 0.0
      %1541 = vmatpush2.msra.mxu0 0.0
      %1542 = vmatprep.subr.mxu0 0.0
      %1543 = vmatpush2.msra.mxu0 0.0
      %1544 = vmatprep.subr.mxu0 0.0
      %1545 = vmatpush2.msra.mxu0 0.0
      %1546 = vmatprep.subr.mxu0 0.0
      %1547 = vmatpush2.msra.mxu0 0.0
      %1548 = vmatprep.subr.mxu0 0.0
      %1549 = vmatpush2.msra.mxu0 0.0
      %1550 = vmatprep.subr.mxu0 0.0
      %1551 = vmatpush2.msra.mxu0 0.0
      %1552 = vmatprep.subr.mxu0 0.0
      %1553 = vmatpush2.msra.mxu0 0.0
      %1554 = vmatprep.subr.mxu0 0.0
      %1555 = vmatpush2.msra.mxu0 0.0
      %1556 = vmatprep.subr.mxu0 0.0
      %1557 = vmatpush2.msra.mxu0 0.0
      %1558 = vmatprep.subr.mxu0 0.0
      %1559 = vmatpush2.msra.mxu0 0.0
      %1560 = vmatprep.subr.mxu0 0.0
      %1561 = vmatpush2.msra.mxu0 0.0
      %1562 = vmatprep.subr.mxu0 0.0
      %1563 = vmatpush2.msra.mxu0 0.0
      %1564 = vmatprep.subr.mxu0 0.0
      %1565 = vmatpush2.msra.mxu0 0.0
      %1566 = vmatprep.subr.mxu0 0.0
      %1567 = vmatpush2.msra.mxu0 0.0
      %1568 = vmatprep.mubr.f32.mxu0 0.0
      %1569 = vmatmul.mubr.f32.gmra.mxu0 %v1502
      %v1570 = vpop.f32.mrf.mxu0
      %v1571 = vadd.f32 0.0, %v1570
      %v1572 = vpop.f32.mrf.mxu0
      %v1573 = vadd.f32 0.0, %v1572
      %1574 = vdwg.mxu0
      %v1575 = vadd.f32 %v1469, %v1571
      %v1576 = vadd.f32 %v1470, %v1573
      %1577 = vrot.lane.b32.xlu0 %v663, 113
      %v1578 = vpop.permute.xlu0 %1577
      %1579 = vrot.lane.b32.xlu0 %v665, 113
      %v1580 = vpop.permute.xlu0 %1579
      %1581 = vrot.lane.b32.xlu0 %v664, 113
      %v1582 = vpop.permute.xlu0 %1581
      %1583 = vrot.lane.b32.xlu0 %v666, 113
      %v1584 = vpop.permute.xlu0 %1583
      %vm1585 = vcmp.lt.s32.totalorder %v983, 113
      %v1586 = vsel %vm1585, %v1578, %v1582
      %v1587 = vsel %vm1585, %v1580, %v1584
      %v1588 = vsel %vm1585, %v1582, %v1578
      %v1589 = vsel %vm1585, %v1584, %v1580
      %s1590 = scalar_lea.vmem %s2, 6
      %v1591 = vld [vmem:[%s1590] ss:$8 sm:$0x3]
      %v1593 = vlaneseq
      %v1594 = vshrl.u32 %v1593, 7
      %v1595 = vsub.s32 0, %v1594
      %v1596 = vrot.slane %v1591, %v1595
      %v1597 = vlaneseq
      %v1598 = vshrl.u32 %v1597, 7
      %v1599 = vsub.s32 1, %v1598
      %v1600 = vrot.slane %v1591, %v1599
      %v1603 = vmul.f32 %v1586, %v1596
      %v1604 = vmul.f32 %v1588, %v1600
      %v1605 = vmul.f32 %v1587, %v1596
      %v1606 = vmul.f32 %v1589, %v1600
      %v1608 = vsel %vm668, %v962, 0
      %1610 = vmatprep.subr.mxu0 0.0
      %1611 = vmatpush1.msra.mxu0 0.0
      %1612 = vmatprep.subr.mxu0 0.0
      %1613 = vmatpush1.msra.mxu0 0.0
      %1614 = vmatprep.subr.mxu0 0.0
      %1615 = vmatpush1.msra.mxu0 0.0
      %1616 = vmatprep.subr.mxu0 0.0
      %1617 = vmatpush1.msra.mxu0 0.0
      %1618 = vmatprep.subr.mxu0 0.0
      %1619 = vmatpush1.msra.mxu0 0.0
      %1620 = vmatprep.subr.mxu0 0.0
      %1621 = vmatpush1.msra.mxu0 0.0
      %1622 = vmatprep.subr.mxu0 0.0
      %1623 = vmatpush1.msra.mxu0 0.0
      %1624 = vmatprep.subr.mxu0 0.0
      %1625 = vmatpush1.msra.mxu0 0.0
      %1626 = vmatprep.subr.mxu0 0.0
      %1627 = vmatpush1.msra.mxu0 0.0
      %1628 = vmatprep.subr.mxu0 0.0
      %1629 = vmatpush1.msra.mxu0 0.0
      %1630 = vmatprep.subr.mxu0 0.0
      %1631 = vmatpush1.msra.mxu0 0.0
      %1632 = vmatprep.subr.mxu0 0.0
      %1633 = vmatpush1.msra.mxu0 0.0
      %1634 = vmatprep.subr.mxu0 0.0
      %1635 = vmatpush1.msra.mxu0 0.0
      %1636 = vmatprep.subr.mxu0 0.0
      %1637 = vmatpush1.msra.mxu0 0.0
      %1638 = vmatprep.subr.mxu0 %v1606
      %1639 = vmatpush1.msra.mxu0 %v1605
      %1640 = vmatprep.subr.mxu0 %v1604
      %1641 = vmatpush1.msra.mxu0 %v1603
      %1642 = vmatprep.subr.mxu0 0.0
      %1643 = vmatpush2.msra.mxu0 0.0
      %1644 = vmatprep.subr.mxu0 0.0
      %1645 = vmatpush2.msra.mxu0 0.0
      %1646 = vmatprep.subr.mxu0 0.0
      %1647 = vmatpush2.msra.mxu0 0.0
      %1648 = vmatprep.subr.mxu0 0.0
      %1649 = vmatpush2.msra.mxu0 0.0
      %1650 = vmatprep.subr.mxu0 0.0
      %1651 = vmatpush2.msra.mxu0 0.0
      %1652 = vmatprep.subr.mxu0 0.0
      %1653 = vmatpush2.msra.mxu0 0.0
      %1654 = vmatprep.subr.mxu0 0.0
      %1655 = vmatpush2.msra.mxu0 0.0
      %1656 = vmatprep.subr.mxu0 0.0
      %1657 = vmatpush2.msra.mxu0 0.0
      %1658 = vmatprep.subr.mxu0 0.0
      %1659 = vmatpush2.msra.mxu0 0.0
      %1660 = vmatprep.subr.mxu0 0.0
      %1661 = vmatpush2.msra.mxu0 0.0
      %1662 = vmatprep.subr.mxu0 0.0
      %1663 = vmatpush2.msra.mxu0 0.0
      %1664 = vmatprep.subr.mxu0 0.0
      %1665 = vmatpush2.msra.mxu0 0.0
      %1666 = vmatprep.subr.mxu0 0.0
      %1667 = vmatpush2.msra.mxu0 0.0
      %1668 = vmatprep.subr.mxu0 0.0
      %1669 = vmatpush2.msra.mxu0 0.0
      %1670 = vmatprep.subr.mxu0 0.0
      %1671 = vmatpush2.msra.mxu0 0.0
      %1672 = vmatprep.subr.mxu0 0.0
      %1673 = vmatpush2.msra.mxu0 0.0
      %1674 = vmatprep.mubr.f32.mxu0 0.0
      %1675 = vmatmul.mubr.f32.gmra.mxu0 %v1608
      %v1676 = vpop.f32.mrf.mxu0
      %v1677 = vadd.f32 0.0, %v1676
      %v1678 = vpop.f32.mrf.mxu0
      %v1679 = vadd.f32 0.0, %v1678
      %1680 = vdwg.mxu0
      %v1681 = vadd.f32 %v1575, %v1677
      %v1682 = vadd.f32 %v1576, %v1679
      %1683 = vrot.lane.b32.xlu0 %v663, 112
      %v1684 = vpop.permute.xlu0 %1683
      %1685 = vrot.lane.b32.xlu0 %v665, 112
      %v1686 = vpop.permute.xlu0 %1685
      %1687 = vrot.lane.b32.xlu0 %v664, 112
      %v1688 = vpop.permute.xlu0 %1687
      %1689 = vrot.lane.b32.xlu0 %v666, 112
      %v1690 = vpop.permute.xlu0 %1689
      %vm1691 = vcmp.lt.s32.totalorder %v983, 112
      %v1692 = vsel %vm1691, %v1684, %v1688
      %v1693 = vsel %vm1691, %v1686, %v1690
      %v1694 = vsel %vm1691, %v1688, %v1684
      %v1695 = vsel %vm1691, %v1690, %v1686
      %s1696 = scalar_lea.vmem %s2, 7
      %v1697 = vld [vmem:[%s1696] ss:$8 sm:$0x3]
      %v1699 = vlaneseq
      %v1700 = vshrl.u32 %v1699, 7
      %v1701 = vsub.s32 0, %v1700
      %v1702 = vrot.slane %v1697, %v1701
      %v1703 = vlaneseq
      %v1704 = vshrl.u32 %v1703, 7
      %v1705 = vsub.s32 1, %v1704
      %v1706 = vrot.slane %v1697, %v1705
      %v1709 = vmul.f32 %v1692, %v1702
      %v1710 = vmul.f32 %v1694, %v1706
      %v1711 = vmul.f32 %v1693, %v1702
      %v1712 = vmul.f32 %v1695, %v1706
      %v1714 = vsel %vm668, %v963, 0
      %1716 = vmatprep.subr.mxu0 0.0
      %1717 = vmatpush1.msra.mxu0 0.0
      %1718 = vmatprep.subr.mxu0 0.0
      %1719 = vmatpush1.msra.mxu0 0.0
      %1720 = vmatprep.subr.mxu0 0.0
      %1721 = vmatpush1.msra.mxu0 0.0
      %1722 = vmatprep.subr.mxu0 0.0
      %1723 = vmatpush1.msra.mxu0 0.0
      %1724 = vmatprep.subr.mxu0 0.0
      %1725 = vmatpush1.msra.mxu0 0.0
      %1726 = vmatprep.subr.mxu0 0.0
      %1727 = vmatpush1.msra.mxu0 0.0
      %1728 = vmatprep.subr.mxu0 0.0
      %1729 = vmatpush1.msra.mxu0 0.0
      %1730 = vmatprep.subr.mxu0 0.0
      %1731 = vmatpush1.msra.mxu0 0.0
      %1732 = vmatprep.subr.mxu0 0.0
      %1733 = vmatpush1.msra.mxu0 0.0
      %1734 = vmatprep.subr.mxu0 0.0
      %1735 = vmatpush1.msra.mxu0 0.0
      %1736 = vmatprep.subr.mxu0 0.0
      %1737 = vmatpush1.msra.mxu0 0.0
      %1738 = vmatprep.subr.mxu0 0.0
      %1739 = vmatpush1.msra.mxu0 0.0
      %1740 = vmatprep.subr.mxu0 0.0
      %1741 = vmatpush1.msra.mxu0 0.0
      %1742 = vmatprep.subr.mxu0 0.0
      %1743 = vmatpush1.msra.mxu0 0.0
      %1744 = vmatprep.subr.mxu0 %v1712
      %1745 = vmatpush1.msra.mxu0 %v1711
      %1746 = vmatprep.subr.mxu0 %v1710
      %1747 = vmatpush1.msra.mxu0 %v1709
      %1748 = vmatprep.subr.mxu0 0.0
      %1749 = vmatpush2.msra.mxu0 0.0
      %1750 = vmatprep.subr.mxu0 0.0
      %1751 = vmatpush2.msra.mxu0 0.0
      %1752 = vmatprep.subr.mxu0 0.0
      %1753 = vmatpush2.msra.mxu0 0.0
      %1754 = vmatprep.subr.mxu0 0.0
      %1755 = vmatpush2.msra.mxu0 0.0
      %1756 = vmatprep.subr.mxu0 0.0
      %1757 = vmatpush2.msra.mxu0 0.0
      %1758 = vmatprep.subr.mxu0 0.0
      %1759 = vmatpush2.msra.mxu0 0.0
      %1760 = vmatprep.subr.mxu0 0.0
      %1761 = vmatpush2.msra.mxu0 0.0
      %1762 = vmatprep.subr.mxu0 0.0
      %1763 = vmatpush2.msra.mxu0 0.0
      %1764 = vmatprep.subr.mxu0 0.0
      %1765 = vmatpush2.msra.mxu0 0.0
      %1766 = vmatprep.subr.mxu0 0.0
      %1767 = vmatpush2.msra.mxu0 0.0
      %1768 = vmatprep.subr.mxu0 0.0
      %1769 = vmatpush2.msra.mxu0 0.0
      %1770 = vmatprep.subr.mxu0 0.0
      %1771 = vmatpush2.msra.mxu0 0.0
      %1772 = vmatprep.subr.mxu0 0.0
      %1773 = vmatpush2.msra.mxu0 0.0
      %1774 = vmatprep.subr.mxu0 0.0
      %1775 = vmatpush2.msra.mxu0 0.0
      %1776 = vmatprep.subr.mxu0 0.0
      %1777 = vmatpush2.msra.mxu0 0.0
      %1778 = vmatprep.subr.mxu0 0.0
      %1779 = vmatpush2.msra.mxu0 0.0
      %1780 = vmatprep.mubr.f32.mxu0 0.0
      %1781 = vmatmul.mubr.f32.gmra.mxu0 %v1714
      %v1782 = vpop.f32.mrf.mxu0
      %v1783 = vadd.f32 0.0, %v1782
      %v1784 = vpop.f32.mrf.mxu0
      %v1785 = vadd.f32 0.0, %v1784
      %1786 = vdwg.mxu0
      %v1787 = vadd.f32 %v1681, %v1783
      %v1788 = vadd.f32 %v1682, %v1785
      %1789 = vrot.lane.b32.xlu0 %v663, 111
      %v1790 = vpop.permute.xlu0 %1789
      %1791 = vrot.lane.b32.xlu0 %v665, 111
      %v1792 = vpop.permute.xlu0 %1791
      %1793 = vrot.lane.b32.xlu0 %v664, 111
      %v1794 = vpop.permute.xlu0 %1793
      %1795 = vrot.lane.b32.xlu0 %v666, 111
      %v1796 = vpop.permute.xlu0 %1795
      %vm1797 = vcmp.lt.s32.totalorder %v983, 111
      %v1798 = vsel %vm1797, %v1790, %v1794
      %v1799 = vsel %vm1797, %v1792, %v1796
      %v1800 = vsel %vm1797, %v1794, %v1790
      %v1801 = vsel %vm1797, %v1796, %v1792
      %s1802 = scalar_lea.vmem %s2, 16
      %v1803 = vld [vmem:[%s1802] ss:$8 sm:$0x3]
      %v1805 = vlaneseq
      %v1806 = vshrl.u32 %v1805, 7
      %v1807 = vsub.s32 0, %v1806
      %v1808 = vrot.slane %v1803, %v1807
      %v1809 = vlaneseq
      %v1810 = vshrl.u32 %v1809, 7
      %v1811 = vsub.s32 1, %v1810
      %v1812 = vrot.slane %v1803, %v1811
      %v1815 = vmul.f32 %v1798, %v1808
      %v1816 = vmul.f32 %v1800, %v1812
      %v1817 = vmul.f32 %v1799, %v1808
      %v1818 = vmul.f32 %v1801, %v1812
      %v1820 = vsel %vm668, %v964, 0
      %1822 = vmatprep.subr.mxu0 0.0
      %1823 = vmatpush1.msra.mxu0 0.0
      %1824 = vmatprep.subr.mxu0 0.0
      %1825 = vmatpush1.msra.mxu0 0.0
      %1826 = vmatprep.subr.mxu0 0.0
      %1827 = vmatpush1.msra.mxu0 0.0
      %1828 = vmatprep.subr.mxu0 0.0
      %1829 = vmatpush1.msra.mxu0 0.0
      %1830 = vmatprep.subr.mxu0 0.0
      %1831 = vmatpush1.msra.mxu0 0.0
      %1832 = vmatprep.subr.mxu0 0.0
      %1833 = vmatpush1.msra.mxu0 0.0
      %1834 = vmatprep.subr.mxu0 0.0
      %1835 = vmatpush1.msra.mxu0 0.0
      %1836 = vmatprep.subr.mxu0 0.0
      %1837 = vmatpush1.msra.mxu0 0.0
      %1838 = vmatprep.subr.mxu0 0.0
      %1839 = vmatpush1.msra.mxu0 0.0
      %1840 = vmatprep.subr.mxu0 0.0
      %1841 = vmatpush1.msra.mxu0 0.0
      %1842 = vmatprep.subr.mxu0 0.0
      %1843 = vmatpush1.msra.mxu0 0.0
      %1844 = vmatprep.subr.mxu0 0.0
      %1845 = vmatpush1.msra.mxu0 0.0
      %1846 = vmatprep.subr.mxu0 0.0
      %1847 = vmatpush1.msra.mxu0 0.0
      %1848 = vmatprep.subr.mxu0 0.0
      %1849 = vmatpush1.msra.mxu0 0.0
      %1850 = vmatprep.subr.mxu0 %v1818
      %1851 = vmatpush1.msra.mxu0 %v1817
      %1852 = vmatprep.subr.mxu0 %v1816
      %1853 = vmatpush1.msra.mxu0 %v1815
      %1854 = vmatprep.subr.mxu0 0.0
      %1855 = vmatpush2.msra.mxu0 0.0
      %1856 = vmatprep.subr.mxu0 0.0
      %1857 = vmatpush2.msra.mxu0 0.0
      %1858 = vmatprep.subr.mxu0 0.0
      %1859 = vmatpush2.msra.mxu0 0.0
      %1860 = vmatprep.subr.mxu0 0.0
      %1861 = vmatpush2.msra.mxu0 0.0
      %1862 = vmatprep.subr.mxu0 0.0
      %1863 = vmatpush2.msra.mxu0 0.0
      %1864 = vmatprep.subr.mxu0 0.0
      %1865 = vmatpush2.msra.mxu0 0.0
      %1866 = vmatprep.subr.mxu0 0.0
      %1867 = vmatpush2.msra.mxu0 0.0
      %1868 = vmatprep.subr.mxu0 0.0
      %1869 = vmatpush2.msra.mxu0 0.0
      %1870 = vmatprep.subr.mxu0 0.0
      %1871 = vmatpush2.msra.mxu0 0.0
      %1872 = vmatprep.subr.mxu0 0.0
      %1873 = vmatpush2.msra.mxu0 0.0
      %1874 = vmatprep.subr.mxu0 0.0
      %1875 = vmatpush2.msra.mxu0 0.0
      %1876 = vmatprep.subr.mxu0 0.0
      %1877 = vmatpush2.msra.mxu0 0.0
      %1878 = vmatprep.subr.mxu0 0.0
      %1879 = vmatpush2.msra.mxu0 0.0
      %1880 = vmatprep.subr.mxu0 0.0
      %1881 = vmatpush2.msra.mxu0 0.0
      %1882 = vmatprep.subr.mxu0 0.0
      %1883 = vmatpush2.msra.mxu0 0.0
      %1884 = vmatprep.subr.mxu0 0.0
      %1885 = vmatpush2.msra.mxu0 0.0
      %1886 = vmatprep.mubr.f32.mxu0 0.0
      %1887 = vmatmul.mubr.f32.gmra.mxu0 %v1820
      %v1888 = vpop.f32.mrf.mxu0
      %v1889 = vadd.f32 0.0, %v1888
      %v1890 = vpop.f32.mrf.mxu0
      %v1891 = vadd.f32 0.0, %v1890
      %1892 = vdwg.mxu0
      %v1893 = vadd.f32 %v1787, %v1889
      %v1894 = vadd.f32 %v1788, %v1891
      %1896 = vset.pattern.permute.xlu0 0
      %1897 = vperm.xlu0 %1896, %v973
      %v1898 = vpop.permute.xlu0 %1897
      %v1900 = vadd.f32 %v1893, %v1898
      %v1901 = vadd.f32 %v1894, %v1898
      %1902 = vst [vmem:[%s494] sm:$0xff] %v1900
      %1903 = vst [vmem:[%s494 + $0x8] sm:$0xff] %v1901
      %p1904 = scmp.lt.s32.totalorder %s26, 1
      %s1905 = scalar_select %p1904, %s26, 1
      %s1906 = smul.addr %s1905, 2
      %s1907 = smul.addr %s1906, 8
      %s1908 = scalar_lea.vmem %s13, %s1907
      %p1909 = scmp.lt.s32.totalorder %s26, 1
      %s1910 = scalar_select %p1909, %s26, 1
      %s1911 = smul.addr %s1910, 4
      %s1912 = scalar_lea.vmem %s14, %s1911
      // Predicated region
      $region73: #{_dynconv_forward.1} parent=71 // pred_check
        %p1913 = pneg %p327
      $region74: #{_dynconv_forward.1} parent=71 // pred_check_branch
        %1915 = sbr.rel (%p1913) target = $region76
      $region75: #{_dynconv_forward.1} parent=71 // pred_region
        _
      $region76: #{_dynconv_forward.1} parent=71 // pred_fallthru
        _
      // Predicated region
      $region77: #{_dynconv_forward.1} parent=71 // pred_check
        %p1916 = pneg %p353
      $region78: #{_dynconv_forward.1} parent=71 // pred_check_branch
        %1918 = sbr.rel (%p1916) target = $region80
      $region79: #{_dynconv_forward.1} parent=71 // pred_region
        _
      $region80: #{_dynconv_forward.1} parent=71 // pred_fallthru
        _
    $region72: #{_dynconv_forward.1} parent=5 // pred_fallthru
      _
    %p1919 = scmp.le.s32.totalorder 2, %s21
    // Predicated region
    $region81: #{_dynconv_forward.1} parent=5 // pred_check
      %p1920 = pneg %p1919
    $region82: #{_dynconv_forward.1} parent=5 // pred_check_branch
      %1922 = sbr.rel (%p1920) target = $region84
    $region83: #{_dynconv_forward.1} parent=5 // pred_region
      %s1923 = ssub.s32 %s21, 2
      // Predicated region
      $region85: #{_dynconv_forward.1} parent=83 // pred_check
        %p1924 = pneg %p333
      $region86: #{_dynconv_forward.1} parent=83 // pred_check_branch
        %1926 = sbr.rel (%p1924) target = $region88
      $region87: #{_dynconv_forward.1} parent=83 // pred_region
        %p1927 = scmp.lt.s32.totalorder %s27, 1
        %s1928 = scalar_select %p1927, %s27, 1
        %s1929 = smul.addr %s1928, 2
        %s1930 = smul.addr %s1929, 8
        %s1931 = scalar_lea.vmem %s13, %s1930
      $region88: #{_dynconv_forward.1} parent=83 // pred_fallthru
        _
      // Predicated region
      $region89: #{_dynconv_forward.1} parent=83 // pred_check
        %p1932 = pneg %p359
      $region90: #{_dynconv_forward.1} parent=83 // pred_check_branch
        %1934 = sbr.rel (%p1932) target = $region92
      $region91: #{_dynconv_forward.1} parent=83 // pred_region
        %p1935 = scmp.lt.s32.totalorder %s27, 1
        %s1936 = scalar_select %p1935, %s27, 1
        %s1937 = smul.addr %s1936, 4
        %s1938 = scalar_lea.vmem %s14, %s1937
      $region92: #{_dynconv_forward.1} parent=83 // pred_fallthru
        _
    $region84: #{_dynconv_forward.1} parent=5 // pred_fallthru
      _
  $region6: #{_dynconv_forward.1} parent=0 // loop_footer
    %s25 = sadd.s32 1, %s21
  $region7: #{_dynconv_forward.1} parent=0 // loop_footer_branch
    %20 = sbr.rel target = $region3
  $region8: #{_dynconv_forward.1} parent=0 // loop_exit
    _

</llo_original>
